<compile_context>
chip_gen: v5e
topology: v5e:2x2
jax: 0.10.0
libtpu: 0.0.40
codegen_flags: <defaults>
</compile_context>

<pallas_src>
import functools

import jax
import jax.numpy as jnp
from jax.experimental import pallas as pl
from jax.experimental.pallas import tpu as pltpu

_LANES = 128
_SUBLANES = 8
_H1 = 20
_H2 = 10


def _make_kernel(tile_rows):
    chunks = tile_rows // _SUBLANES

    def kernel(w1_ref, b1_ref, w2_ref, b2_ref, w3_ref, b3_ref, x_ref, o_ref):
        # Walk the (tile_rows, 128) block in (8, 128) one-vreg chunks so all
        # intermediates stay in vector registers.
        @pl.loop(0, chunks)
        def _(c):
            r = pl.multiple_of(c * _SUBLANES, _SUBLANES)
            x = x_ref[pl.ds(r, _SUBLANES), :]                        # [8, 128]

            # Layer 1: Linear(1, 20) == outer product -> 20 scalar FMAs (VPU)
            # + 20 tanh (EUP).  The 0.5 of Sigmoidal is pre-folded into
            # w1/b1, so the activation is a bare tanh.
            h1 = [jnp.tanh(x * w1_ref[j] + b1_ref[j]) for j in range(_H1)]

            # Layers 2 + 3 fused: for each hidden-2 unit k, do the unrolled
            # length-20 dot product, tanh it, and immediately fold it into
            # the final scalar output (keeps the live set small).
            out = None
            for k in range(_H2):
                acc = h1[0] * w2_ref[k] + b2_ref[k]
                for j in range(1, _H1):
                    acc = acc + h1[j] * w2_ref[j * _H2 + k]
                t = jnp.tanh(acc)
                if k == 0:
                    out = t * w3_ref[0] + b3_ref[0]
                else:
                    out = out + t * w3_ref[k]

            o_ref[pl.ds(r, _SUBLANES), :] = out

    return kernel


def _round_up(a, b):
    return ((a + b - 1) // b) * b


@functools.partial(jax.jit, static_argnames=("max_tile_rows",))
def learned_fn(x, w1, b1, w2, b2, w3, b3, *, max_tile_rows=2048):
    n = x.shape[0]
    rows = pl.cdiv(n, _LANES)

    # Bounded-padding tiling: choose the number of grid steps first, then
    # size each tile to cdiv(rows, num_tiles) rounded up to a sublane
    # multiple, so padding waste is < 8 rows per tile.
    num_tiles = pl.cdiv(rows, max_tile_rows)
    if rows > _SUBLANES:
        num_tiles = max(num_tiles, 2)          # v7x: both TensorCores get work
    if num_tiles > 1 and num_tiles % 2:
        num_tiles += 1                         # even split across the 2 TCs
    tile_rows = _round_up(pl.cdiv(rows, num_tiles), _SUBLANES)
    rows_p = num_tiles * tile_rows
    n_pad = rows_p * _LANES

    # Lane-dense reshape: batch -> (sublane, lane); zero-pad the tail.
    xf = jnp.reshape(x.astype(jnp.float32), (-1,))
    xf = jnp.pad(xf, (0, n_pad - n))
    x2 = xf.reshape(rows_p, _LANES)

    # Fold the 0.5 of Sigmoidal(x) = tanh(x/2) into the first two layers.
    w1f = w1.astype(jnp.float32).reshape(-1) * 0.5
    b1f = b1.astype(jnp.float32).reshape(-1) * 0.5
    w2f = w2.astype(jnp.float32).reshape(-1) * 0.5   # row-major [in,out]: w2[j*10+k]
    b2f = b2.astype(jnp.float32).reshape(-1) * 0.5
    w3f = w3.astype(jnp.float32).reshape(-1)
    b3f = b3.astype(jnp.float32).reshape(-1)

    smem = pl.BlockSpec(memory_space=pltpu.MemorySpace.SMEM)
    data = pl.BlockSpec((tile_rows, _LANES), lambda i: (i, 0))

    out2 = pl.pallas_call(
        _make_kernel(tile_rows),
        out_shape=jax.ShapeDtypeStruct((rows_p, _LANES), jnp.float32),
        grid=(num_tiles,),
        in_specs=[smem] * 6 + [data],
        out_specs=data,
        compiler_params=pltpu.CompilerParams(
            dimension_semantics=("parallel",)),
        cost_estimate=pl.CostEstimate(
            flops=460 * n_pad,
            transcendentals=30 * n_pad,
            bytes_accessed=8 * n_pad + 4 * 261),
    )(w1f, b1f, w2f, b2f, w3f, b3f, x2)

    return out2.reshape(-1)[:n].reshape(n, 1)


def init_params(key):
    """Deterministic init matching nn.Linear default U(-1/sqrt(fan_in), +)."""
    k = jax.random.split(key, 6)

    def uni(subkey, shape, fan_in):
        bound = 1.0 / jnp.sqrt(jnp.float32(fan_in))
        return jax.random.uniform(subkey, shape, jnp.float32, -bound, bound)

    w1 = uni(k[0], (1, 20), 1)      # [in, out] (transposed vs PyTorch [out, in])
    b1 = uni(k[1], (20,), 1)
    w2 = uni(k[2], (20, 10), 20)
    b2 = uni(k[3], (10,), 20)
    w3 = uni(k[4], (10, 1), 10)
    b3 = uni(k[5], (1,), 10)
    return w1, b1, w2, b2, w3, b3


def reference(x, w1, b1, w2, b2, w3, b3):
    # Pure-JAX reference using the original exp formulation.  Linear layers
    # are written as explicit broadcast-multiply-sums so they stay in exact
    # f32 (no default-precision MXU matmul) for a tight comparison.
    def sig(v):
        z = jnp.exp(-v)
        return (1.0 - z) / (1.0 + z)

    h1 = sig(x * w1[0] + b1)                                        # [N, 20]
    h2 = sig(jnp.sum(h1[:, :, None] * w2[None, :, :], axis=1) + b2)  # [N, 10]
    return jnp.sum(h2 * w3[:, 0][None, :], axis=1, keepdims=True) + b3


if __name__ == "__main__":
    key = jax.random.PRNGKey(0)
    kx, kp = jax.random.split(key)
    params = init_params(kp)

    # Small check (single (8,128) tile, heavy tail padding).
    batch = 8
    x = jax.random.normal(kx, (batch, 1), jnp.float32)
    out = jax.block_until_ready(learned_fn(x, *params))
    ref = reference(x, *params)
    assert out.shape == (batch, 1)
    assert jnp.allclose(out, ref, atol=1e-5, rtol=1e-5)

    # Larger check: 2 grid steps, multi-chunk inner loop, ragged tail.
    batch2 = 4100
    x2 = jax.random.normal(kx, (batch2, 1), jnp.float32)
    out2 = jax.block_until_ready(learned_fn(x2, *params))
    ref2 = reference(x2, *params)
    assert out2.shape == (batch2, 1)
    assert jnp.allclose(out2, ref2, atol=1e-5, rtol=1e-5)

    print("KERNEL_OK")
</pallas_src>

<mosaic_0001>
module attributes {stable_mosaic.version = 11 : i64} {
  func.func @kernel(%arg0: i32, %arg1: memref<20xf32, #tpu.memory_space<smem>>, %arg2: memref<20xf32, #tpu.memory_space<smem>>, %arg3: memref<200xf32, #tpu.memory_space<smem>>, %arg4: memref<10xf32, #tpu.memory_space<smem>>, %arg5: memref<10xf32, #tpu.memory_space<smem>>, %arg6: memref<1xf32, #tpu.memory_space<smem>>, %arg7: memref<8x128xf32, #tpu.memory_space<vmem>>, %arg8: memref<8x128xf32, #tpu.memory_space<vmem>>) attributes {dimension_semantics = [#tpu.dimension_semantics<parallel>], iteration_bounds = array<i64: 1>, scalar_prefetch = 0 : i64, scratch_operands = 0 : i64, tpu.core_type = #tpu.core_type<tc>, window_params = [{transform_indices = @transform_0, window_bounds = array<i64: 20>}, {transform_indices = @transform_1, window_bounds = array<i64: 20>}, {transform_indices = @transform_2, window_bounds = array<i64: 200>}, {transform_indices = @transform_3, window_bounds = array<i64: 10>}, {transform_indices = @transform_4, window_bounds = array<i64: 10>}, {transform_indices = @transform_5, window_bounds = array<i64: 1>}, {transform_indices = @transform_6, window_bounds = array<i64: 8, 128>}, {transform_indices = @transform_7, window_bounds = array<i64: 8, 128>}]} {
    %c0_i32 = arith.constant 0 : i32
    %c1_i32 = arith.constant 1 : i32
    %0 = arith.muli %c0_i32, %c1_i32 : i32
    %c0_i32_0 = arith.constant 0 : i32
    %1 = arith.addi %c0_i32_0, %0 : i32
    %c8_i32 = arith.constant 8 : i32
    %2 = arith.muli %1, %c8_i32 : i32
    %3 = tpu.assume_multiple %2, 8 : i32
    %4 = arith.index_cast %3 : i32 to index
    %c0 = arith.constant 0 : index
    %5 = vector.load %arg7[%4, %c0] : memref<8x128xf32, #tpu.memory_space<vmem>>, vector<8x128xf32>
    %c0_1 = arith.constant 0 : index
    %6 = memref.load %arg1[%c0_1] : memref<20xf32, #tpu.memory_space<smem>>
    %7 = vector.broadcast %6 : f32 to vector<8x128xf32>
    %8 = arith.mulf %5, %7 : vector<8x128xf32>
    %c0_2 = arith.constant 0 : index
    %9 = memref.load %arg2[%c0_2] : memref<20xf32, #tpu.memory_space<smem>>
    %10 = vector.broadcast %9 : f32 to vector<8x128xf32>
    %11 = arith.addf %8, %10 : vector<8x128xf32>
    %12 = math.tanh %11 : vector<8x128xf32>
    %c1 = arith.constant 1 : index
    %13 = memref.load %arg1[%c1] : memref<20xf32, #tpu.memory_space<smem>>
    %14 = vector.broadcast %13 : f32 to vector<8x128xf32>
    %15 = arith.mulf %5, %14 : vector<8x128xf32>
    %c1_3 = arith.constant 1 : index
    %16 = memref.load %arg2[%c1_3] : memref<20xf32, #tpu.memory_space<smem>>
    %17 = vector.broadcast %16 : f32 to vector<8x128xf32>
    %18 = arith.addf %15, %17 : vector<8x128xf32>
    %19 = math.tanh %18 : vector<8x128xf32>
    %c2 = arith.constant 2 : index
    %20 = memref.load %arg1[%c2] : memref<20xf32, #tpu.memory_space<smem>>
    %21 = vector.broadcast %20 : f32 to vector<8x128xf32>
    %22 = arith.mulf %5, %21 : vector<8x128xf32>
    %c2_4 = arith.constant 2 : index
    %23 = memref.load %arg2[%c2_4] : memref<20xf32, #tpu.memory_space<smem>>
    %24 = vector.broadcast %23 : f32 to vector<8x128xf32>
    %25 = arith.addf %22, %24 : vector<8x128xf32>
    %26 = math.tanh %25 : vector<8x128xf32>
    %c3 = arith.constant 3 : index
    %27 = memref.load %arg1[%c3] : memref<20xf32, #tpu.memory_space<smem>>
    %28 = vector.broadcast %27 : f32 to vector<8x128xf32>
    %29 = arith.mulf %5, %28 : vector<8x128xf32>
    %c3_5 = arith.constant 3 : index
    %30 = memref.load %arg2[%c3_5] : memref<20xf32, #tpu.memory_space<smem>>
    %31 = vector.broadcast %30 : f32 to vector<8x128xf32>
    %32 = arith.addf %29, %31 : vector<8x128xf32>
    %33 = math.tanh %32 : vector<8x128xf32>
    %c4 = arith.constant 4 : index
    %34 = memref.load %arg1[%c4] : memref<20xf32, #tpu.memory_space<smem>>
    %35 = vector.broadcast %34 : f32 to vector<8x128xf32>
    %36 = arith.mulf %5, %35 : vector<8x128xf32>
    %c4_6 = arith.constant 4 : index
    %37 = memref.load %arg2[%c4_6] : memref<20xf32, #tpu.memory_space<smem>>
    %38 = vector.broadcast %37 : f32 to vector<8x128xf32>
    %39 = arith.addf %36, %38 : vector<8x128xf32>
    %40 = math.tanh %39 : vector<8x128xf32>
    %c5 = arith.constant 5 : index
    %41 = memref.load %arg1[%c5] : memref<20xf32, #tpu.memory_space<smem>>
    %42 = vector.broadcast %41 : f32 to vector<8x128xf32>
    %43 = arith.mulf %5, %42 : vector<8x128xf32>
    %c5_7 = arith.constant 5 : index
    %44 = memref.load %arg2[%c5_7] : memref<20xf32, #tpu.memory_space<smem>>
    %45 = vector.broadcast %44 : f32 to vector<8x128xf32>
    %46 = arith.addf %43, %45 : vector<8x128xf32>
    %47 = math.tanh %46 : vector<8x128xf32>
    %c6 = arith.constant 6 : index
    %48 = memref.load %arg1[%c6] : memref<20xf32, #tpu.memory_space<smem>>
    %49 = vector.broadcast %48 : f32 to vector<8x128xf32>
    %50 = arith.mulf %5, %49 : vector<8x128xf32>
    %c6_8 = arith.constant 6 : index
    %51 = memref.load %arg2[%c6_8] : memref<20xf32, #tpu.memory_space<smem>>
    %52 = vector.broadcast %51 : f32 to vector<8x128xf32>
    %53 = arith.addf %50, %52 : vector<8x128xf32>
    %54 = math.tanh %53 : vector<8x128xf32>
    %c7 = arith.constant 7 : index
    %55 = memref.load %arg1[%c7] : memref<20xf32, #tpu.memory_space<smem>>
    %56 = vector.broadcast %55 : f32 to vector<8x128xf32>
    %57 = arith.mulf %5, %56 : vector<8x128xf32>
    %c7_9 = arith.constant 7 : index
    %58 = memref.load %arg2[%c7_9] : memref<20xf32, #tpu.memory_space<smem>>
    %59 = vector.broadcast %58 : f32 to vector<8x128xf32>
    %60 = arith.addf %57, %59 : vector<8x128xf32>
    %61 = math.tanh %60 : vector<8x128xf32>
    %c8 = arith.constant 8 : index
    %62 = memref.load %arg1[%c8] : memref<20xf32, #tpu.memory_space<smem>>
    %63 = vector.broadcast %62 : f32 to vector<8x128xf32>
    %64 = arith.mulf %5, %63 : vector<8x128xf32>
    %c8_10 = arith.constant 8 : index
    %65 = memref.load %arg2[%c8_10] : memref<20xf32, #tpu.memory_space<smem>>
    %66 = vector.broadcast %65 : f32 to vector<8x128xf32>
    %67 = arith.addf %64, %66 : vector<8x128xf32>
    %68 = math.tanh %67 : vector<8x128xf32>
    %c9 = arith.constant 9 : index
    %69 = memref.load %arg1[%c9] : memref<20xf32, #tpu.memory_space<smem>>
    %70 = vector.broadcast %69 : f32 to vector<8x128xf32>
    %71 = arith.mulf %5, %70 : vector<8x128xf32>
    %c9_11 = arith.constant 9 : index
    %72 = memref.load %arg2[%c9_11] : memref<20xf32, #tpu.memory_space<smem>>
    %73 = vector.broadcast %72 : f32 to vector<8x128xf32>
    %74 = arith.addf %71, %73 : vector<8x128xf32>
    %75 = math.tanh %74 : vector<8x128xf32>
    %c10 = arith.constant 10 : index
    %76 = memref.load %arg1[%c10] : memref<20xf32, #tpu.memory_space<smem>>
    %77 = vector.broadcast %76 : f32 to vector<8x128xf32>
    %78 = arith.mulf %5, %77 : vector<8x128xf32>
    %c10_12 = arith.constant 10 : index
    %79 = memref.load %arg2[%c10_12] : memref<20xf32, #tpu.memory_space<smem>>
    %80 = vector.broadcast %79 : f32 to vector<8x128xf32>
    %81 = arith.addf %78, %80 : vector<8x128xf32>
    %82 = math.tanh %81 : vector<8x128xf32>
    %c11 = arith.constant 11 : index
    %83 = memref.load %arg1[%c11] : memref<20xf32, #tpu.memory_space<smem>>
    %84 = vector.broadcast %83 : f32 to vector<8x128xf32>
    %85 = arith.mulf %5, %84 : vector<8x128xf32>
    %c11_13 = arith.constant 11 : index
    %86 = memref.load %arg2[%c11_13] : memref<20xf32, #tpu.memory_space<smem>>
    %87 = vector.broadcast %86 : f32 to vector<8x128xf32>
    %88 = arith.addf %85, %87 : vector<8x128xf32>
    %89 = math.tanh %88 : vector<8x128xf32>
    %c12 = arith.constant 12 : index
    %90 = memref.load %arg1[%c12] : memref<20xf32, #tpu.memory_space<smem>>
    %91 = vector.broadcast %90 : f32 to vector<8x128xf32>
    %92 = arith.mulf %5, %91 : vector<8x128xf32>
    %c12_14 = arith.constant 12 : index
    %93 = memref.load %arg2[%c12_14] : memref<20xf32, #tpu.memory_space<smem>>
    %94 = vector.broadcast %93 : f32 to vector<8x128xf32>
    %95 = arith.addf %92, %94 : vector<8x128xf32>
    %96 = math.tanh %95 : vector<8x128xf32>
    %c13 = arith.constant 13 : index
    %97 = memref.load %arg1[%c13] : memref<20xf32, #tpu.memory_space<smem>>
    %98 = vector.broadcast %97 : f32 to vector<8x128xf32>
    %99 = arith.mulf %5, %98 : vector<8x128xf32>
    %c13_15 = arith.constant 13 : index
    %100 = memref.load %arg2[%c13_15] : memref<20xf32, #tpu.memory_space<smem>>
    %101 = vector.broadcast %100 : f32 to vector<8x128xf32>
    %102 = arith.addf %99, %101 : vector<8x128xf32>
    %103 = math.tanh %102 : vector<8x128xf32>
    %c14 = arith.constant 14 : index
    %104 = memref.load %arg1[%c14] : memref<20xf32, #tpu.memory_space<smem>>
    %105 = vector.broadcast %104 : f32 to vector<8x128xf32>
    %106 = arith.mulf %5, %105 : vector<8x128xf32>
    %c14_16 = arith.constant 14 : index
    %107 = memref.load %arg2[%c14_16] : memref<20xf32, #tpu.memory_space<smem>>
    %108 = vector.broadcast %107 : f32 to vector<8x128xf32>
    %109 = arith.addf %106, %108 : vector<8x128xf32>
    %110 = math.tanh %109 : vector<8x128xf32>
    %c15 = arith.constant 15 : index
    %111 = memref.load %arg1[%c15] : memref<20xf32, #tpu.memory_space<smem>>
    %112 = vector.broadcast %111 : f32 to vector<8x128xf32>
    %113 = arith.mulf %5, %112 : vector<8x128xf32>
    %c15_17 = arith.constant 15 : index
    %114 = memref.load %arg2[%c15_17] : memref<20xf32, #tpu.memory_space<smem>>
    %115 = vector.broadcast %114 : f32 to vector<8x128xf32>
    %116 = arith.addf %113, %115 : vector<8x128xf32>
    %117 = math.tanh %116 : vector<8x128xf32>
    %c16 = arith.constant 16 : index
    %118 = memref.load %arg1[%c16] : memref<20xf32, #tpu.memory_space<smem>>
    %119 = vector.broadcast %118 : f32 to vector<8x128xf32>
    %120 = arith.mulf %5, %119 : vector<8x128xf32>
    %c16_18 = arith.constant 16 : index
    %121 = memref.load %arg2[%c16_18] : memref<20xf32, #tpu.memory_space<smem>>
    %122 = vector.broadcast %121 : f32 to vector<8x128xf32>
    %123 = arith.addf %120, %122 : vector<8x128xf32>
    %124 = math.tanh %123 : vector<8x128xf32>
    %c17 = arith.constant 17 : index
    %125 = memref.load %arg1[%c17] : memref<20xf32, #tpu.memory_space<smem>>
    %126 = vector.broadcast %125 : f32 to vector<8x128xf32>
    %127 = arith.mulf %5, %126 : vector<8x128xf32>
    %c17_19 = arith.constant 17 : index
    %128 = memref.load %arg2[%c17_19] : memref<20xf32, #tpu.memory_space<smem>>
    %129 = vector.broadcast %128 : f32 to vector<8x128xf32>
    %130 = arith.addf %127, %129 : vector<8x128xf32>
    %131 = math.tanh %130 : vector<8x128xf32>
    %c18 = arith.constant 18 : index
    %132 = memref.load %arg1[%c18] : memref<20xf32, #tpu.memory_space<smem>>
    %133 = vector.broadcast %132 : f32 to vector<8x128xf32>
    %134 = arith.mulf %5, %133 : vector<8x128xf32>
    %c18_20 = arith.constant 18 : index
    %135 = memref.load %arg2[%c18_20] : memref<20xf32, #tpu.memory_space<smem>>
    %136 = vector.broadcast %135 : f32 to vector<8x128xf32>
    %137 = arith.addf %134, %136 : vector<8x128xf32>
    %138 = math.tanh %137 : vector<8x128xf32>
    %c19 = arith.constant 19 : index
    %139 = memref.load %arg1[%c19] : memref<20xf32, #tpu.memory_space<smem>>
    %140 = vector.broadcast %139 : f32 to vector<8x128xf32>
    %141 = arith.mulf %5, %140 : vector<8x128xf32>
    %c19_21 = arith.constant 19 : index
    %142 = memref.load %arg2[%c19_21] : memref<20xf32, #tpu.memory_space<smem>>
    %143 = vector.broadcast %142 : f32 to vector<8x128xf32>
    %144 = arith.addf %141, %143 : vector<8x128xf32>
    %145 = math.tanh %144 : vector<8x128xf32>
    %c0_22 = arith.constant 0 : index
    %146 = memref.load %arg3[%c0_22] : memref<200xf32, #tpu.memory_space<smem>>
    %147 = vector.broadcast %146 : f32 to vector<8x128xf32>
    %148 = arith.mulf %12, %147 : vector<8x128xf32>
    %c0_23 = arith.constant 0 : index
    %149 = memref.load %arg4[%c0_23] : memref<10xf32, #tpu.memory_space<smem>>
    %150 = vector.broadcast %149 : f32 to vector<8x128xf32>
    %151 = arith.addf %148, %150 : vector<8x128xf32>
    %c10_24 = arith.constant 10 : index
    %152 = memref.load %arg3[%c10_24] : memref<200xf32, #tpu.memory_space<smem>>
    %153 = vector.broadcast %152 : f32 to vector<8x128xf32>
    %154 = arith.mulf %19, %153 : vector<8x128xf32>
    %155 = arith.addf %151, %154 : vector<8x128xf32>
    %c20 = arith.constant 20 : index
    %156 = memref.load %arg3[%c20] : memref<200xf32, #tpu.memory_space<smem>>
    %157 = vector.broadcast %156 : f32 to vector<8x128xf32>
    %158 = arith.mulf %26, %157 : vector<8x128xf32>
    %159 = arith.addf %155, %158 : vector<8x128xf32>
    %c30 = arith.constant 30 : index
    %160 = memref.load %arg3[%c30] : memref<200xf32, #tpu.memory_space<smem>>
    %161 = vector.broadcast %160 : f32 to vector<8x128xf32>
    %162 = arith.mulf %33, %161 : vector<8x128xf32>
    %163 = arith.addf %159, %162 : vector<8x128xf32>
    %c40 = arith.constant 40 : index
    %164 = memref.load %arg3[%c40] : memref<200xf32, #tpu.memory_space<smem>>
    %165 = vector.broadcast %164 : f32 to vector<8x128xf32>
    %166 = arith.mulf %40, %165 : vector<8x128xf32>
    %167 = arith.addf %163, %166 : vector<8x128xf32>
    %c50 = arith.constant 50 : index
    %168 = memref.load %arg3[%c50] : memref<200xf32, #tpu.memory_space<smem>>
    %169 = vector.broadcast %168 : f32 to vector<8x128xf32>
    %170 = arith.mulf %47, %169 : vector<8x128xf32>
    %171 = arith.addf %167, %170 : vector<8x128xf32>
    %c60 = arith.constant 60 : index
    %172 = memref.load %arg3[%c60] : memref<200xf32, #tpu.memory_space<smem>>
    %173 = vector.broadcast %172 : f32 to vector<8x128xf32>
    %174 = arith.mulf %54, %173 : vector<8x128xf32>
    %175 = arith.addf %171, %174 : vector<8x128xf32>
    %c70 = arith.constant 70 : index
    %176 = memref.load %arg3[%c70] : memref<200xf32, #tpu.memory_space<smem>>
    %177 = vector.broadcast %176 : f32 to vector<8x128xf32>
    %178 = arith.mulf %61, %177 : vector<8x128xf32>
    %179 = arith.addf %175, %178 : vector<8x128xf32>
    %c80 = arith.constant 80 : index
    %180 = memref.load %arg3[%c80] : memref<200xf32, #tpu.memory_space<smem>>
    %181 = vector.broadcast %180 : f32 to vector<8x128xf32>
    %182 = arith.mulf %68, %181 : vector<8x128xf32>
    %183 = arith.addf %179, %182 : vector<8x128xf32>
    %c90 = arith.constant 90 : index
    %184 = memref.load %arg3[%c90] : memref<200xf32, #tpu.memory_space<smem>>
    %185 = vector.broadcast %184 : f32 to vector<8x128xf32>
    %186 = arith.mulf %75, %185 : vector<8x128xf32>
    %187 = arith.addf %183, %186 : vector<8x128xf32>
    %c100 = arith.constant 100 : index
    %188 = memref.load %arg3[%c100] : memref<200xf32, #tpu.memory_space<smem>>
    %189 = vector.broadcast %188 : f32 to vector<8x128xf32>
    %190 = arith.mulf %82, %189 : vector<8x128xf32>
    %191 = arith.addf %187, %190 : vector<8x128xf32>
    %c110 = arith.constant 110 : index
    %192 = memref.load %arg3[%c110] : memref<200xf32, #tpu.memory_space<smem>>
    %193 = vector.broadcast %192 : f32 to vector<8x128xf32>
    %194 = arith.mulf %89, %193 : vector<8x128xf32>
    %195 = arith.addf %191, %194 : vector<8x128xf32>
    %c120 = arith.constant 120 : index
    %196 = memref.load %arg3[%c120] : memref<200xf32, #tpu.memory_space<smem>>
    %197 = vector.broadcast %196 : f32 to vector<8x128xf32>
    %198 = arith.mulf %96, %197 : vector<8x128xf32>
    %199 = arith.addf %195, %198 : vector<8x128xf32>
    %c130 = arith.constant 130 : index
    %200 = memref.load %arg3[%c130] : memref<200xf32, #tpu.memory_space<smem>>
    %201 = vector.broadcast %200 : f32 to vector<8x128xf32>
    %202 = arith.mulf %103, %201 : vector<8x128xf32>
    %203 = arith.addf %199, %202 : vector<8x128xf32>
    %c140 = arith.constant 140 : index
    %204 = memref.load %arg3[%c140] : memref<200xf32, #tpu.memory_space<smem>>
    %205 = vector.broadcast %204 : f32 to vector<8x128xf32>
    %206 = arith.mulf %110, %205 : vector<8x128xf32>
    %207 = arith.addf %203, %206 : vector<8x128xf32>
    %c150 = arith.constant 150 : index
    %208 = memref.load %arg3[%c150] : memref<200xf32, #tpu.memory_space<smem>>
    %209 = vector.broadcast %208 : f32 to vector<8x128xf32>
    %210 = arith.mulf %117, %209 : vector<8x128xf32>
    %211 = arith.addf %207, %210 : vector<8x128xf32>
    %c160 = arith.constant 160 : index
    %212 = memref.load %arg3[%c160] : memref<200xf32, #tpu.memory_space<smem>>
    %213 = vector.broadcast %212 : f32 to vector<8x128xf32>
    %214 = arith.mulf %124, %213 : vector<8x128xf32>
    %215 = arith.addf %211, %214 : vector<8x128xf32>
    %c170 = arith.constant 170 : index
    %216 = memref.load %arg3[%c170] : memref<200xf32, #tpu.memory_space<smem>>
    %217 = vector.broadcast %216 : f32 to vector<8x128xf32>
    %218 = arith.mulf %131, %217 : vector<8x128xf32>
    %219 = arith.addf %215, %218 : vector<8x128xf32>
    %c180 = arith.constant 180 : index
    %220 = memref.load %arg3[%c180] : memref<200xf32, #tpu.memory_space<smem>>
    %221 = vector.broadcast %220 : f32 to vector<8x128xf32>
    %222 = arith.mulf %138, %221 : vector<8x128xf32>
    %223 = arith.addf %219, %222 : vector<8x128xf32>
    %c190 = arith.constant 190 : index
    %224 = memref.load %arg3[%c190] : memref<200xf32, #tpu.memory_space<smem>>
    %225 = vector.broadcast %224 : f32 to vector<8x128xf32>
    %226 = arith.mulf %145, %225 : vector<8x128xf32>
    %227 = arith.addf %223, %226 : vector<8x128xf32>
    %228 = math.tanh %227 : vector<8x128xf32>
    %c0_25 = arith.constant 0 : index
    %229 = memref.load %arg5[%c0_25] : memref<10xf32, #tpu.memory_space<smem>>
    %230 = vector.broadcast %229 : f32 to vector<8x128xf32>
    %231 = arith.mulf %228, %230 : vector<8x128xf32>
    %c0_26 = arith.constant 0 : index
    %232 = memref.load %arg6[%c0_26] : memref<1xf32, #tpu.memory_space<smem>>
    %233 = vector.broadcast %232 : f32 to vector<8x128xf32>
    %234 = arith.addf %231, %233 : vector<8x128xf32>
    %c1_27 = arith.constant 1 : index
    %235 = memref.load %arg3[%c1_27] : memref<200xf32, #tpu.memory_space<smem>>
    %236 = vector.broadcast %235 : f32 to vector<8x128xf32>
    %237 = arith.mulf %12, %236 : vector<8x128xf32>
    %c1_28 = arith.constant 1 : index
    %238 = memref.load %arg4[%c1_28] : memref<10xf32, #tpu.memory_space<smem>>
    %239 = vector.broadcast %238 : f32 to vector<8x128xf32>
    %240 = arith.addf %237, %239 : vector<8x128xf32>
    %c11_29 = arith.constant 11 : index
    %241 = memref.load %arg3[%c11_29] : memref<200xf32, #tpu.memory_space<smem>>
    %242 = vector.broadcast %241 : f32 to vector<8x128xf32>
    %243 = arith.mulf %19, %242 : vector<8x128xf32>
    %244 = arith.addf %240, %243 : vector<8x128xf32>
    %c21 = arith.constant 21 : index
    %245 = memref.load %arg3[%c21] : memref<200xf32, #tpu.memory_space<smem>>
    %246 = vector.broadcast %245 : f32 to vector<8x128xf32>
    %247 = arith.mulf %26, %246 : vector<8x128xf32>
    %248 = arith.addf %244, %247 : vector<8x128xf32>
    %c31 = arith.constant 31 : index
    %249 = memref.load %arg3[%c31] : memref<200xf32, #tpu.memory_space<smem>>
    %250 = vector.broadcast %249 : f32 to vector<8x128xf32>
    %251 = arith.mulf %33, %250 : vector<8x128xf32>
    %252 = arith.addf %248, %251 : vector<8x128xf32>
    %c41 = arith.constant 41 : index
    %253 = memref.load %arg3[%c41] : memref<200xf32, #tpu.memory_space<smem>>
    %254 = vector.broadcast %253 : f32 to vector<8x128xf32>
    %255 = arith.mulf %40, %254 : vector<8x128xf32>
    %256 = arith.addf %252, %255 : vector<8x128xf32>
    %c51 = arith.constant 51 : index
    %257 = memref.load %arg3[%c51] : memref<200xf32, #tpu.memory_space<smem>>
    %258 = vector.broadcast %257 : f32 to vector<8x128xf32>
    %259 = arith.mulf %47, %258 : vector<8x128xf32>
    %260 = arith.addf %256, %259 : vector<8x128xf32>
    %c61 = arith.constant 61 : index
    %261 = memref.load %arg3[%c61] : memref<200xf32, #tpu.memory_space<smem>>
    %262 = vector.broadcast %261 : f32 to vector<8x128xf32>
    %263 = arith.mulf %54, %262 : vector<8x128xf32>
    %264 = arith.addf %260, %263 : vector<8x128xf32>
    %c71 = arith.constant 71 : index
    %265 = memref.load %arg3[%c71] : memref<200xf32, #tpu.memory_space<smem>>
    %266 = vector.broadcast %265 : f32 to vector<8x128xf32>
    %267 = arith.mulf %61, %266 : vector<8x128xf32>
    %268 = arith.addf %264, %267 : vector<8x128xf32>
    %c81 = arith.constant 81 : index
    %269 = memref.load %arg3[%c81] : memref<200xf32, #tpu.memory_space<smem>>
    %270 = vector.broadcast %269 : f32 to vector<8x128xf32>
    %271 = arith.mulf %68, %270 : vector<8x128xf32>
    %272 = arith.addf %268, %271 : vector<8x128xf32>
    %c91 = arith.constant 91 : index
    %273 = memref.load %arg3[%c91] : memref<200xf32, #tpu.memory_space<smem>>
    %274 = vector.broadcast %273 : f32 to vector<8x128xf32>
    %275 = arith.mulf %75, %274 : vector<8x128xf32>
    %276 = arith.addf %272, %275 : vector<8x128xf32>
    %c101 = arith.constant 101 : index
    %277 = memref.load %arg3[%c101] : memref<200xf32, #tpu.memory_space<smem>>
    %278 = vector.broadcast %277 : f32 to vector<8x128xf32>
    %279 = arith.mulf %82, %278 : vector<8x128xf32>
    %280 = arith.addf %276, %279 : vector<8x128xf32>
    %c111 = arith.constant 111 : index
    %281 = memref.load %arg3[%c111] : memref<200xf32, #tpu.memory_space<smem>>
    %282 = vector.broadcast %281 : f32 to vector<8x128xf32>
    %283 = arith.mulf %89, %282 : vector<8x128xf32>
    %284 = arith.addf %280, %283 : vector<8x128xf32>
    %c121 = arith.constant 121 : index
    %285 = memref.load %arg3[%c121] : memref<200xf32, #tpu.memory_space<smem>>
    %286 = vector.broadcast %285 : f32 to vector<8x128xf32>
    %287 = arith.mulf %96, %286 : vector<8x128xf32>
    %288 = arith.addf %284, %287 : vector<8x128xf32>
    %c131 = arith.constant 131 : index
    %289 = memref.load %arg3[%c131] : memref<200xf32, #tpu.memory_space<smem>>
    %290 = vector.broadcast %289 : f32 to vector<8x128xf32>
    %291 = arith.mulf %103, %290 : vector<8x128xf32>
    %292 = arith.addf %288, %291 : vector<8x128xf32>
    %c141 = arith.constant 141 : index
    %293 = memref.load %arg3[%c141] : memref<200xf32, #tpu.memory_space<smem>>
    %294 = vector.broadcast %293 : f32 to vector<8x128xf32>
    %295 = arith.mulf %110, %294 : vector<8x128xf32>
    %296 = arith.addf %292, %295 : vector<8x128xf32>
    %c151 = arith.constant 151 : index
    %297 = memref.load %arg3[%c151] : memref<200xf32, #tpu.memory_space<smem>>
    %298 = vector.broadcast %297 : f32 to vector<8x128xf32>
    %299 = arith.mulf %117, %298 : vector<8x128xf32>
    %300 = arith.addf %296, %299 : vector<8x128xf32>
    %c161 = arith.constant 161 : index
    %301 = memref.load %arg3[%c161] : memref<200xf32, #tpu.memory_space<smem>>
    %302 = vector.broadcast %301 : f32 to vector<8x128xf32>
    %303 = arith.mulf %124, %302 : vector<8x128xf32>
    %304 = arith.addf %300, %303 : vector<8x128xf32>
    %c171 = arith.constant 171 : index
    %305 = memref.load %arg3[%c171] : memref<200xf32, #tpu.memory_space<smem>>
    %306 = vector.broadcast %305 : f32 to vector<8x128xf32>
    %307 = arith.mulf %131, %306 : vector<8x128xf32>
    %308 = arith.addf %304, %307 : vector<8x128xf32>
    %c181 = arith.constant 181 : index
    %309 = memref.load %arg3[%c181] : memref<200xf32, #tpu.memory_space<smem>>
    %310 = vector.broadcast %309 : f32 to vector<8x128xf32>
    %311 = arith.mulf %138, %310 : vector<8x128xf32>
    %312 = arith.addf %308, %311 : vector<8x128xf32>
    %c191 = arith.constant 191 : index
    %313 = memref.load %arg3[%c191] : memref<200xf32, #tpu.memory_space<smem>>
    %314 = vector.broadcast %313 : f32 to vector<8x128xf32>
    %315 = arith.mulf %145, %314 : vector<8x128xf32>
    %316 = arith.addf %312, %315 : vector<8x128xf32>
    %317 = math.tanh %316 : vector<8x128xf32>
    %c1_30 = arith.constant 1 : index
    %318 = memref.load %arg5[%c1_30] : memref<10xf32, #tpu.memory_space<smem>>
    %319 = vector.broadcast %318 : f32 to vector<8x128xf32>
    %320 = arith.mulf %317, %319 : vector<8x128xf32>
    %321 = arith.addf %234, %320 : vector<8x128xf32>
    %c2_31 = arith.constant 2 : index
    %322 = memref.load %arg3[%c2_31] : memref<200xf32, #tpu.memory_space<smem>>
    %323 = vector.broadcast %322 : f32 to vector<8x128xf32>
    %324 = arith.mulf %12, %323 : vector<8x128xf32>
    %c2_32 = arith.constant 2 : index
    %325 = memref.load %arg4[%c2_32] : memref<10xf32, #tpu.memory_space<smem>>
    %326 = vector.broadcast %325 : f32 to vector<8x128xf32>
    %327 = arith.addf %324, %326 : vector<8x128xf32>
    %c12_33 = arith.constant 12 : index
    %328 = memref.load %arg3[%c12_33] : memref<200xf32, #tpu.memory_space<smem>>
    %329 = vector.broadcast %328 : f32 to vector<8x128xf32>
    %330 = arith.mulf %19, %329 : vector<8x128xf32>
    %331 = arith.addf %327, %330 : vector<8x128xf32>
    %c22 = arith.constant 22 : index
    %332 = memref.load %arg3[%c22] : memref<200xf32, #tpu.memory_space<smem>>
    %333 = vector.broadcast %332 : f32 to vector<8x128xf32>
    %334 = arith.mulf %26, %333 : vector<8x128xf32>
    %335 = arith.addf %331, %334 : vector<8x128xf32>
    %c32 = arith.constant 32 : index
    %336 = memref.load %arg3[%c32] : memref<200xf32, #tpu.memory_space<smem>>
    %337 = vector.broadcast %336 : f32 to vector<8x128xf32>
    %338 = arith.mulf %33, %337 : vector<8x128xf32>
    %339 = arith.addf %335, %338 : vector<8x128xf32>
    %c42 = arith.constant 42 : index
    %340 = memref.load %arg3[%c42] : memref<200xf32, #tpu.memory_space<smem>>
    %341 = vector.broadcast %340 : f32 to vector<8x128xf32>
    %342 = arith.mulf %40, %341 : vector<8x128xf32>
    %343 = arith.addf %339, %342 : vector<8x128xf32>
    %c52 = arith.constant 52 : index
    %344 = memref.load %arg3[%c52] : memref<200xf32, #tpu.memory_space<smem>>
    %345 = vector.broadcast %344 : f32 to vector<8x128xf32>
    %346 = arith.mulf %47, %345 : vector<8x128xf32>
    %347 = arith.addf %343, %346 : vector<8x128xf32>
    %c62 = arith.constant 62 : index
    %348 = memref.load %arg3[%c62] : memref<200xf32, #tpu.memory_space<smem>>
    %349 = vector.broadcast %348 : f32 to vector<8x128xf32>
    %350 = arith.mulf %54, %349 : vector<8x128xf32>
    %351 = arith.addf %347, %350 : vector<8x128xf32>
    %c72 = arith.constant 72 : index
    %352 = memref.load %arg3[%c72] : memref<200xf32, #tpu.memory_space<smem>>
    %353 = vector.broadcast %352 : f32 to vector<8x128xf32>
    %354 = arith.mulf %61, %353 : vector<8x128xf32>
    %355 = arith.addf %351, %354 : vector<8x128xf32>
    %c82 = arith.constant 82 : index
    %356 = memref.load %arg3[%c82] : memref<200xf32, #tpu.memory_space<smem>>
    %357 = vector.broadcast %356 : f32 to vector<8x128xf32>
    %358 = arith.mulf %68, %357 : vector<8x128xf32>
    %359 = arith.addf %355, %358 : vector<8x128xf32>
    %c92 = arith.constant 92 : index
    %360 = memref.load %arg3[%c92] : memref<200xf32, #tpu.memory_space<smem>>
    %361 = vector.broadcast %360 : f32 to vector<8x128xf32>
    %362 = arith.mulf %75, %361 : vector<8x128xf32>
    %363 = arith.addf %359, %362 : vector<8x128xf32>
    %c102 = arith.constant 102 : index
    %364 = memref.load %arg3[%c102] : memref<200xf32, #tpu.memory_space<smem>>
    %365 = vector.broadcast %364 : f32 to vector<8x128xf32>
    %366 = arith.mulf %82, %365 : vector<8x128xf32>
    %367 = arith.addf %363, %366 : vector<8x128xf32>
    %c112 = arith.constant 112 : index
    %368 = memref.load %arg3[%c112] : memref<200xf32, #tpu.memory_space<smem>>
    %369 = vector.broadcast %368 : f32 to vector<8x128xf32>
    %370 = arith.mulf %89, %369 : vector<8x128xf32>
    %371 = arith.addf %367, %370 : vector<8x128xf32>
    %c122 = arith.constant 122 : index
    %372 = memref.load %arg3[%c122] : memref<200xf32, #tpu.memory_space<smem>>
    %373 = vector.broadcast %372 : f32 to vector<8x128xf32>
    %374 = arith.mulf %96, %373 : vector<8x128xf32>
    %375 = arith.addf %371, %374 : vector<8x128xf32>
    %c132 = arith.constant 132 : index
    %376 = memref.load %arg3[%c132] : memref<200xf32, #tpu.memory_space<smem>>
    %377 = vector.broadcast %376 : f32 to vector<8x128xf32>
    %378 = arith.mulf %103, %377 : vector<8x128xf32>
    %379 = arith.addf %375, %378 : vector<8x128xf32>
    %c142 = arith.constant 142 : index
    %380 = memref.load %arg3[%c142] : memref<200xf32, #tpu.memory_space<smem>>
    %381 = vector.broadcast %380 : f32 to vector<8x128xf32>
    %382 = arith.mulf %110, %381 : vector<8x128xf32>
    %383 = arith.addf %379, %382 : vector<8x128xf32>
    %c152 = arith.constant 152 : index
    %384 = memref.load %arg3[%c152] : memref<200xf32, #tpu.memory_space<smem>>
    %385 = vector.broadcast %384 : f32 to vector<8x128xf32>
    %386 = arith.mulf %117, %385 : vector<8x128xf32>
    %387 = arith.addf %383, %386 : vector<8x128xf32>
    %c162 = arith.constant 162 : index
    %388 = memref.load %arg3[%c162] : memref<200xf32, #tpu.memory_space<smem>>
    %389 = vector.broadcast %388 : f32 to vector<8x128xf32>
    %390 = arith.mulf %124, %389 : vector<8x128xf32>
    %391 = arith.addf %387, %390 : vector<8x128xf32>
    %c172 = arith.constant 172 : index
    %392 = memref.load %arg3[%c172] : memref<200xf32, #tpu.memory_space<smem>>
    %393 = vector.broadcast %392 : f32 to vector<8x128xf32>
    %394 = arith.mulf %131, %393 : vector<8x128xf32>
    %395 = arith.addf %391, %394 : vector<8x128xf32>
    %c182 = arith.constant 182 : index
    %396 = memref.load %arg3[%c182] : memref<200xf32, #tpu.memory_space<smem>>
    %397 = vector.broadcast %396 : f32 to vector<8x128xf32>
    %398 = arith.mulf %138, %397 : vector<8x128xf32>
    %399 = arith.addf %395, %398 : vector<8x128xf32>
    %c192 = arith.constant 192 : index
    %400 = memref.load %arg3[%c192] : memref<200xf32, #tpu.memory_space<smem>>
    %401 = vector.broadcast %400 : f32 to vector<8x128xf32>
    %402 = arith.mulf %145, %401 : vector<8x128xf32>
    %403 = arith.addf %399, %402 : vector<8x128xf32>
    %404 = math.tanh %403 : vector<8x128xf32>
    %c2_34 = arith.constant 2 : index
    %405 = memref.load %arg5[%c2_34] : memref<10xf32, #tpu.memory_space<smem>>
    %406 = vector.broadcast %405 : f32 to vector<8x128xf32>
    %407 = arith.mulf %404, %406 : vector<8x128xf32>
    %408 = arith.addf %321, %407 : vector<8x128xf32>
    %c3_35 = arith.constant 3 : index
    %409 = memref.load %arg3[%c3_35] : memref<200xf32, #tpu.memory_space<smem>>
    %410 = vector.broadcast %409 : f32 to vector<8x128xf32>
    %411 = arith.mulf %12, %410 : vector<8x128xf32>
    %c3_36 = arith.constant 3 : index
    %412 = memref.load %arg4[%c3_36] : memref<10xf32, #tpu.memory_space<smem>>
    %413 = vector.broadcast %412 : f32 to vector<8x128xf32>
    %414 = arith.addf %411, %413 : vector<8x128xf32>
    %c13_37 = arith.constant 13 : index
    %415 = memref.load %arg3[%c13_37] : memref<200xf32, #tpu.memory_space<smem>>
    %416 = vector.broadcast %415 : f32 to vector<8x128xf32>
    %417 = arith.mulf %19, %416 : vector<8x128xf32>
    %418 = arith.addf %414, %417 : vector<8x128xf32>
    %c23 = arith.constant 23 : index
    %419 = memref.load %arg3[%c23] : memref<200xf32, #tpu.memory_space<smem>>
    %420 = vector.broadcast %419 : f32 to vector<8x128xf32>
    %421 = arith.mulf %26, %420 : vector<8x128xf32>
    %422 = arith.addf %418, %421 : vector<8x128xf32>
    %c33 = arith.constant 33 : index
    %423 = memref.load %arg3[%c33] : memref<200xf32, #tpu.memory_space<smem>>
    %424 = vector.broadcast %423 : f32 to vector<8x128xf32>
    %425 = arith.mulf %33, %424 : vector<8x128xf32>
    %426 = arith.addf %422, %425 : vector<8x128xf32>
    %c43 = arith.constant 43 : index
    %427 = memref.load %arg3[%c43] : memref<200xf32, #tpu.memory_space<smem>>
    %428 = vector.broadcast %427 : f32 to vector<8x128xf32>
    %429 = arith.mulf %40, %428 : vector<8x128xf32>
    %430 = arith.addf %426, %429 : vector<8x128xf32>
    %c53 = arith.constant 53 : index
    %431 = memref.load %arg3[%c53] : memref<200xf32, #tpu.memory_space<smem>>
    %432 = vector.broadcast %431 : f32 to vector<8x128xf32>
    %433 = arith.mulf %47, %432 : vector<8x128xf32>
    %434 = arith.addf %430, %433 : vector<8x128xf32>
    %c63 = arith.constant 63 : index
    %435 = memref.load %arg3[%c63] : memref<200xf32, #tpu.memory_space<smem>>
    %436 = vector.broadcast %435 : f32 to vector<8x128xf32>
    %437 = arith.mulf %54, %436 : vector<8x128xf32>
    %438 = arith.addf %434, %437 : vector<8x128xf32>
    %c73 = arith.constant 73 : index
    %439 = memref.load %arg3[%c73] : memref<200xf32, #tpu.memory_space<smem>>
    %440 = vector.broadcast %439 : f32 to vector<8x128xf32>
    %441 = arith.mulf %61, %440 : vector<8x128xf32>
    %442 = arith.addf %438, %441 : vector<8x128xf32>
    %c83 = arith.constant 83 : index
    %443 = memref.load %arg3[%c83] : memref<200xf32, #tpu.memory_space<smem>>
    %444 = vector.broadcast %443 : f32 to vector<8x128xf32>
    %445 = arith.mulf %68, %444 : vector<8x128xf32>
    %446 = arith.addf %442, %445 : vector<8x128xf32>
    %c93 = arith.constant 93 : index
    %447 = memref.load %arg3[%c93] : memref<200xf32, #tpu.memory_space<smem>>
    %448 = vector.broadcast %447 : f32 to vector<8x128xf32>
    %449 = arith.mulf %75, %448 : vector<8x128xf32>
    %450 = arith.addf %446, %449 : vector<8x128xf32>
    %c103 = arith.constant 103 : index
    %451 = memref.load %arg3[%c103] : memref<200xf32, #tpu.memory_space<smem>>
    %452 = vector.broadcast %451 : f32 to vector<8x128xf32>
    %453 = arith.mulf %82, %452 : vector<8x128xf32>
    %454 = arith.addf %450, %453 : vector<8x128xf32>
    %c113 = arith.constant 113 : index
    %455 = memref.load %arg3[%c113] : memref<200xf32, #tpu.memory_space<smem>>
    %456 = vector.broadcast %455 : f32 to vector<8x128xf32>
    %457 = arith.mulf %89, %456 : vector<8x128xf32>
    %458 = arith.addf %454, %457 : vector<8x128xf32>
    %c123 = arith.constant 123 : index
    %459 = memref.load %arg3[%c123] : memref<200xf32, #tpu.memory_space<smem>>
    %460 = vector.broadcast %459 : f32 to vector<8x128xf32>
    %461 = arith.mulf %96, %460 : vector<8x128xf32>
    %462 = arith.addf %458, %461 : vector<8x128xf32>
    %c133 = arith.constant 133 : index
    %463 = memref.load %arg3[%c133] : memref<200xf32, #tpu.memory_space<smem>>
    %464 = vector.broadcast %463 : f32 to vector<8x128xf32>
    %465 = arith.mulf %103, %464 : vector<8x128xf32>
    %466 = arith.addf %462, %465 : vector<8x128xf32>
    %c143 = arith.constant 143 : index
    %467 = memref.load %arg3[%c143] : memref<200xf32, #tpu.memory_space<smem>>
    %468 = vector.broadcast %467 : f32 to vector<8x128xf32>
    %469 = arith.mulf %110, %468 : vector<8x128xf32>
    %470 = arith.addf %466, %469 : vector<8x128xf32>
    %c153 = arith.constant 153 : index
    %471 = memref.load %arg3[%c153] : memref<200xf32, #tpu.memory_space<smem>>
    %472 = vector.broadcast %471 : f32 to vector<8x128xf32>
    %473 = arith.mulf %117, %472 : vector<8x128xf32>
    %474 = arith.addf %470, %473 : vector<8x128xf32>
    %c163 = arith.constant 163 : index
    %475 = memref.load %arg3[%c163] : memref<200xf32, #tpu.memory_space<smem>>
    %476 = vector.broadcast %475 : f32 to vector<8x128xf32>
    %477 = arith.mulf %124, %476 : vector<8x128xf32>
    %478 = arith.addf %474, %477 : vector<8x128xf32>
    %c173 = arith.constant 173 : index
    %479 = memref.load %arg3[%c173] : memref<200xf32, #tpu.memory_space<smem>>
    %480 = vector.broadcast %479 : f32 to vector<8x128xf32>
    %481 = arith.mulf %131, %480 : vector<8x128xf32>
    %482 = arith.addf %478, %481 : vector<8x128xf32>
    %c183 = arith.constant 183 : index
    %483 = memref.load %arg3[%c183] : memref<200xf32, #tpu.memory_space<smem>>
    %484 = vector.broadcast %483 : f32 to vector<8x128xf32>
    %485 = arith.mulf %138, %484 : vector<8x128xf32>
    %486 = arith.addf %482, %485 : vector<8x128xf32>
    %c193 = arith.constant 193 : index
    %487 = memref.load %arg3[%c193] : memref<200xf32, #tpu.memory_space<smem>>
    %488 = vector.broadcast %487 : f32 to vector<8x128xf32>
    %489 = arith.mulf %145, %488 : vector<8x128xf32>
    %490 = arith.addf %486, %489 : vector<8x128xf32>
    %491 = math.tanh %490 : vector<8x128xf32>
    %c3_38 = arith.constant 3 : index
    %492 = memref.load %arg5[%c3_38] : memref<10xf32, #tpu.memory_space<smem>>
    %493 = vector.broadcast %492 : f32 to vector<8x128xf32>
    %494 = arith.mulf %491, %493 : vector<8x128xf32>
    %495 = arith.addf %408, %494 : vector<8x128xf32>
    %c4_39 = arith.constant 4 : index
    %496 = memref.load %arg3[%c4_39] : memref<200xf32, #tpu.memory_space<smem>>
    %497 = vector.broadcast %496 : f32 to vector<8x128xf32>
    %498 = arith.mulf %12, %497 : vector<8x128xf32>
    %c4_40 = arith.constant 4 : index
    %499 = memref.load %arg4[%c4_40] : memref<10xf32, #tpu.memory_space<smem>>
    %500 = vector.broadcast %499 : f32 to vector<8x128xf32>
    %501 = arith.addf %498, %500 : vector<8x128xf32>
    %c14_41 = arith.constant 14 : index
    %502 = memref.load %arg3[%c14_41] : memref<200xf32, #tpu.memory_space<smem>>
    %503 = vector.broadcast %502 : f32 to vector<8x128xf32>
    %504 = arith.mulf %19, %503 : vector<8x128xf32>
    %505 = arith.addf %501, %504 : vector<8x128xf32>
    %c24 = arith.constant 24 : index
    %506 = memref.load %arg3[%c24] : memref<200xf32, #tpu.memory_space<smem>>
    %507 = vector.broadcast %506 : f32 to vector<8x128xf32>
    %508 = arith.mulf %26, %507 : vector<8x128xf32>
    %509 = arith.addf %505, %508 : vector<8x128xf32>
    %c34 = arith.constant 34 : index
    %510 = memref.load %arg3[%c34] : memref<200xf32, #tpu.memory_space<smem>>
    %511 = vector.broadcast %510 : f32 to vector<8x128xf32>
    %512 = arith.mulf %33, %511 : vector<8x128xf32>
    %513 = arith.addf %509, %512 : vector<8x128xf32>
    %c44 = arith.constant 44 : index
    %514 = memref.load %arg3[%c44] : memref<200xf32, #tpu.memory_space<smem>>
    %515 = vector.broadcast %514 : f32 to vector<8x128xf32>
    %516 = arith.mulf %40, %515 : vector<8x128xf32>
    %517 = arith.addf %513, %516 : vector<8x128xf32>
    %c54 = arith.constant 54 : index
    %518 = memref.load %arg3[%c54] : memref<200xf32, #tpu.memory_space<smem>>
    %519 = vector.broadcast %518 : f32 to vector<8x128xf32>
    %520 = arith.mulf %47, %519 : vector<8x128xf32>
    %521 = arith.addf %517, %520 : vector<8x128xf32>
    %c64 = arith.constant 64 : index
    %522 = memref.load %arg3[%c64] : memref<200xf32, #tpu.memory_space<smem>>
    %523 = vector.broadcast %522 : f32 to vector<8x128xf32>
    %524 = arith.mulf %54, %523 : vector<8x128xf32>
    %525 = arith.addf %521, %524 : vector<8x128xf32>
    %c74 = arith.constant 74 : index
    %526 = memref.load %arg3[%c74] : memref<200xf32, #tpu.memory_space<smem>>
    %527 = vector.broadcast %526 : f32 to vector<8x128xf32>
    %528 = arith.mulf %61, %527 : vector<8x128xf32>
    %529 = arith.addf %525, %528 : vector<8x128xf32>
    %c84 = arith.constant 84 : index
    %530 = memref.load %arg3[%c84] : memref<200xf32, #tpu.memory_space<smem>>
    %531 = vector.broadcast %530 : f32 to vector<8x128xf32>
    %532 = arith.mulf %68, %531 : vector<8x128xf32>
    %533 = arith.addf %529, %532 : vector<8x128xf32>
    %c94 = arith.constant 94 : index
    %534 = memref.load %arg3[%c94] : memref<200xf32, #tpu.memory_space<smem>>
    %535 = vector.broadcast %534 : f32 to vector<8x128xf32>
    %536 = arith.mulf %75, %535 : vector<8x128xf32>
    %537 = arith.addf %533, %536 : vector<8x128xf32>
    %c104 = arith.constant 104 : index
    %538 = memref.load %arg3[%c104] : memref<200xf32, #tpu.memory_space<smem>>
    %539 = vector.broadcast %538 : f32 to vector<8x128xf32>
    %540 = arith.mulf %82, %539 : vector<8x128xf32>
    %541 = arith.addf %537, %540 : vector<8x128xf32>
    %c114 = arith.constant 114 : index
    %542 = memref.load %arg3[%c114] : memref<200xf32, #tpu.memory_space<smem>>
    %543 = vector.broadcast %542 : f32 to vector<8x128xf32>
    %544 = arith.mulf %89, %543 : vector<8x128xf32>
    %545 = arith.addf %541, %544 : vector<8x128xf32>
    %c124 = arith.constant 124 : index
    %546 = memref.load %arg3[%c124] : memref<200xf32, #tpu.memory_space<smem>>
    %547 = vector.broadcast %546 : f32 to vector<8x128xf32>
    %548 = arith.mulf %96, %547 : vector<8x128xf32>
    %549 = arith.addf %545, %548 : vector<8x128xf32>
    %c134 = arith.constant 134 : index
    %550 = memref.load %arg3[%c134] : memref<200xf32, #tpu.memory_space<smem>>
    %551 = vector.broadcast %550 : f32 to vector<8x128xf32>
    %552 = arith.mulf %103, %551 : vector<8x128xf32>
    %553 = arith.addf %549, %552 : vector<8x128xf32>
    %c144 = arith.constant 144 : index
    %554 = memref.load %arg3[%c144] : memref<200xf32, #tpu.memory_space<smem>>
    %555 = vector.broadcast %554 : f32 to vector<8x128xf32>
    %556 = arith.mulf %110, %555 : vector<8x128xf32>
    %557 = arith.addf %553, %556 : vector<8x128xf32>
    %c154 = arith.constant 154 : index
    %558 = memref.load %arg3[%c154] : memref<200xf32, #tpu.memory_space<smem>>
    %559 = vector.broadcast %558 : f32 to vector<8x128xf32>
    %560 = arith.mulf %117, %559 : vector<8x128xf32>
    %561 = arith.addf %557, %560 : vector<8x128xf32>
    %c164 = arith.constant 164 : index
    %562 = memref.load %arg3[%c164] : memref<200xf32, #tpu.memory_space<smem>>
    %563 = vector.broadcast %562 : f32 to vector<8x128xf32>
    %564 = arith.mulf %124, %563 : vector<8x128xf32>
    %565 = arith.addf %561, %564 : vector<8x128xf32>
    %c174 = arith.constant 174 : index
    %566 = memref.load %arg3[%c174] : memref<200xf32, #tpu.memory_space<smem>>
    %567 = vector.broadcast %566 : f32 to vector<8x128xf32>
    %568 = arith.mulf %131, %567 : vector<8x128xf32>
    %569 = arith.addf %565, %568 : vector<8x128xf32>
    %c184 = arith.constant 184 : index
    %570 = memref.load %arg3[%c184] : memref<200xf32, #tpu.memory_space<smem>>
    %571 = vector.broadcast %570 : f32 to vector<8x128xf32>
    %572 = arith.mulf %138, %571 : vector<8x128xf32>
    %573 = arith.addf %569, %572 : vector<8x128xf32>
    %c194 = arith.constant 194 : index
    %574 = memref.load %arg3[%c194] : memref<200xf32, #tpu.memory_space<smem>>
    %575 = vector.broadcast %574 : f32 to vector<8x128xf32>
    %576 = arith.mulf %145, %575 : vector<8x128xf32>
    %577 = arith.addf %573, %576 : vector<8x128xf32>
    %578 = math.tanh %577 : vector<8x128xf32>
    %c4_42 = arith.constant 4 : index
    %579 = memref.load %arg5[%c4_42] : memref<10xf32, #tpu.memory_space<smem>>
    %580 = vector.broadcast %579 : f32 to vector<8x128xf32>
    %581 = arith.mulf %578, %580 : vector<8x128xf32>
    %582 = arith.addf %495, %581 : vector<8x128xf32>
    %c5_43 = arith.constant 5 : index
    %583 = memref.load %arg3[%c5_43] : memref<200xf32, #tpu.memory_space<smem>>
    %584 = vector.broadcast %583 : f32 to vector<8x128xf32>
    %585 = arith.mulf %12, %584 : vector<8x128xf32>
    %c5_44 = arith.constant 5 : index
    %586 = memref.load %arg4[%c5_44] : memref<10xf32, #tpu.memory_space<smem>>
    %587 = vector.broadcast %586 : f32 to vector<8x128xf32>
    %588 = arith.addf %585, %587 : vector<8x128xf32>
    %c15_45 = arith.constant 15 : index
    %589 = memref.load %arg3[%c15_45] : memref<200xf32, #tpu.memory_space<smem>>
    %590 = vector.broadcast %589 : f32 to vector<8x128xf32>
    %591 = arith.mulf %19, %590 : vector<8x128xf32>
    %592 = arith.addf %588, %591 : vector<8x128xf32>
    %c25 = arith.constant 25 : index
    %593 = memref.load %arg3[%c25] : memref<200xf32, #tpu.memory_space<smem>>
    %594 = vector.broadcast %593 : f32 to vector<8x128xf32>
    %595 = arith.mulf %26, %594 : vector<8x128xf32>
    %596 = arith.addf %592, %595 : vector<8x128xf32>
    %c35 = arith.constant 35 : index
    %597 = memref.load %arg3[%c35] : memref<200xf32, #tpu.memory_space<smem>>
    %598 = vector.broadcast %597 : f32 to vector<8x128xf32>
    %599 = arith.mulf %33, %598 : vector<8x128xf32>
    %600 = arith.addf %596, %599 : vector<8x128xf32>
    %c45 = arith.constant 45 : index
    %601 = memref.load %arg3[%c45] : memref<200xf32, #tpu.memory_space<smem>>
    %602 = vector.broadcast %601 : f32 to vector<8x128xf32>
    %603 = arith.mulf %40, %602 : vector<8x128xf32>
    %604 = arith.addf %600, %603 : vector<8x128xf32>
    %c55 = arith.constant 55 : index
    %605 = memref.load %arg3[%c55] : memref<200xf32, #tpu.memory_space<smem>>
    %606 = vector.broadcast %605 : f32 to vector<8x128xf32>
    %607 = arith.mulf %47, %606 : vector<8x128xf32>
    %608 = arith.addf %604, %607 : vector<8x128xf32>
    %c65 = arith.constant 65 : index
    %609 = memref.load %arg3[%c65] : memref<200xf32, #tpu.memory_space<smem>>
    %610 = vector.broadcast %609 : f32 to vector<8x128xf32>
    %611 = arith.mulf %54, %610 : vector<8x128xf32>
    %612 = arith.addf %608, %611 : vector<8x128xf32>
    %c75 = arith.constant 75 : index
    %613 = memref.load %arg3[%c75] : memref<200xf32, #tpu.memory_space<smem>>
    %614 = vector.broadcast %613 : f32 to vector<8x128xf32>
    %615 = arith.mulf %61, %614 : vector<8x128xf32>
    %616 = arith.addf %612, %615 : vector<8x128xf32>
    %c85 = arith.constant 85 : index
    %617 = memref.load %arg3[%c85] : memref<200xf32, #tpu.memory_space<smem>>
    %618 = vector.broadcast %617 : f32 to vector<8x128xf32>
    %619 = arith.mulf %68, %618 : vector<8x128xf32>
    %620 = arith.addf %616, %619 : vector<8x128xf32>
    %c95 = arith.constant 95 : index
    %621 = memref.load %arg3[%c95] : memref<200xf32, #tpu.memory_space<smem>>
    %622 = vector.broadcast %621 : f32 to vector<8x128xf32>
    %623 = arith.mulf %75, %622 : vector<8x128xf32>
    %624 = arith.addf %620, %623 : vector<8x128xf32>
    %c105 = arith.constant 105 : index
    %625 = memref.load %arg3[%c105] : memref<200xf32, #tpu.memory_space<smem>>
    %626 = vector.broadcast %625 : f32 to vector<8x128xf32>
    %627 = arith.mulf %82, %626 : vector<8x128xf32>
    %628 = arith.addf %624, %627 : vector<8x128xf32>
    %c115 = arith.constant 115 : index
    %629 = memref.load %arg3[%c115] : memref<200xf32, #tpu.memory_space<smem>>
    %630 = vector.broadcast %629 : f32 to vector<8x128xf32>
    %631 = arith.mulf %89, %630 : vector<8x128xf32>
    %632 = arith.addf %628, %631 : vector<8x128xf32>
    %c125 = arith.constant 125 : index
    %633 = memref.load %arg3[%c125] : memref<200xf32, #tpu.memory_space<smem>>
    %634 = vector.broadcast %633 : f32 to vector<8x128xf32>
    %635 = arith.mulf %96, %634 : vector<8x128xf32>
    %636 = arith.addf %632, %635 : vector<8x128xf32>
    %c135 = arith.constant 135 : index
    %637 = memref.load %arg3[%c135] : memref<200xf32, #tpu.memory_space<smem>>
    %638 = vector.broadcast %637 : f32 to vector<8x128xf32>
    %639 = arith.mulf %103, %638 : vector<8x128xf32>
    %640 = arith.addf %636, %639 : vector<8x128xf32>
    %c145 = arith.constant 145 : index
    %641 = memref.load %arg3[%c145] : memref<200xf32, #tpu.memory_space<smem>>
    %642 = vector.broadcast %641 : f32 to vector<8x128xf32>
    %643 = arith.mulf %110, %642 : vector<8x128xf32>
    %644 = arith.addf %640, %643 : vector<8x128xf32>
    %c155 = arith.constant 155 : index
    %645 = memref.load %arg3[%c155] : memref<200xf32, #tpu.memory_space<smem>>
    %646 = vector.broadcast %645 : f32 to vector<8x128xf32>
    %647 = arith.mulf %117, %646 : vector<8x128xf32>
    %648 = arith.addf %644, %647 : vector<8x128xf32>
    %c165 = arith.constant 165 : index
    %649 = memref.load %arg3[%c165] : memref<200xf32, #tpu.memory_space<smem>>
    %650 = vector.broadcast %649 : f32 to vector<8x128xf32>
    %651 = arith.mulf %124, %650 : vector<8x128xf32>
    %652 = arith.addf %648, %651 : vector<8x128xf32>
    %c175 = arith.constant 175 : index
    %653 = memref.load %arg3[%c175] : memref<200xf32, #tpu.memory_space<smem>>
    %654 = vector.broadcast %653 : f32 to vector<8x128xf32>
    %655 = arith.mulf %131, %654 : vector<8x128xf32>
    %656 = arith.addf %652, %655 : vector<8x128xf32>
    %c185 = arith.constant 185 : index
    %657 = memref.load %arg3[%c185] : memref<200xf32, #tpu.memory_space<smem>>
    %658 = vector.broadcast %657 : f32 to vector<8x128xf32>
    %659 = arith.mulf %138, %658 : vector<8x128xf32>
    %660 = arith.addf %656, %659 : vector<8x128xf32>
    %c195 = arith.constant 195 : index
    %661 = memref.load %arg3[%c195] : memref<200xf32, #tpu.memory_space<smem>>
    %662 = vector.broadcast %661 : f32 to vector<8x128xf32>
    %663 = arith.mulf %145, %662 : vector<8x128xf32>
    %664 = arith.addf %660, %663 : vector<8x128xf32>
    %665 = math.tanh %664 : vector<8x128xf32>
    %c5_46 = arith.constant 5 : index
    %666 = memref.load %arg5[%c5_46] : memref<10xf32, #tpu.memory_space<smem>>
    %667 = vector.broadcast %666 : f32 to vector<8x128xf32>
    %668 = arith.mulf %665, %667 : vector<8x128xf32>
    %669 = arith.addf %582, %668 : vector<8x128xf32>
    %c6_47 = arith.constant 6 : index
    %670 = memref.load %arg3[%c6_47] : memref<200xf32, #tpu.memory_space<smem>>
    %671 = vector.broadcast %670 : f32 to vector<8x128xf32>
    %672 = arith.mulf %12, %671 : vector<8x128xf32>
    %c6_48 = arith.constant 6 : index
    %673 = memref.load %arg4[%c6_48] : memref<10xf32, #tpu.memory_space<smem>>
    %674 = vector.broadcast %673 : f32 to vector<8x128xf32>
    %675 = arith.addf %672, %674 : vector<8x128xf32>
    %c16_49 = arith.constant 16 : index
    %676 = memref.load %arg3[%c16_49] : memref<200xf32, #tpu.memory_space<smem>>
    %677 = vector.broadcast %676 : f32 to vector<8x128xf32>
    %678 = arith.mulf %19, %677 : vector<8x128xf32>
    %679 = arith.addf %675, %678 : vector<8x128xf32>
    %c26 = arith.constant 26 : index
    %680 = memref.load %arg3[%c26] : memref<200xf32, #tpu.memory_space<smem>>
    %681 = vector.broadcast %680 : f32 to vector<8x128xf32>
    %682 = arith.mulf %26, %681 : vector<8x128xf32>
    %683 = arith.addf %679, %682 : vector<8x128xf32>
    %c36 = arith.constant 36 : index
    %684 = memref.load %arg3[%c36] : memref<200xf32, #tpu.memory_space<smem>>
    %685 = vector.broadcast %684 : f32 to vector<8x128xf32>
    %686 = arith.mulf %33, %685 : vector<8x128xf32>
    %687 = arith.addf %683, %686 : vector<8x128xf32>
    %c46 = arith.constant 46 : index
    %688 = memref.load %arg3[%c46] : memref<200xf32, #tpu.memory_space<smem>>
    %689 = vector.broadcast %688 : f32 to vector<8x128xf32>
    %690 = arith.mulf %40, %689 : vector<8x128xf32>
    %691 = arith.addf %687, %690 : vector<8x128xf32>
    %c56 = arith.constant 56 : index
    %692 = memref.load %arg3[%c56] : memref<200xf32, #tpu.memory_space<smem>>
    %693 = vector.broadcast %692 : f32 to vector<8x128xf32>
    %694 = arith.mulf %47, %693 : vector<8x128xf32>
    %695 = arith.addf %691, %694 : vector<8x128xf32>
    %c66 = arith.constant 66 : index
    %696 = memref.load %arg3[%c66] : memref<200xf32, #tpu.memory_space<smem>>
    %697 = vector.broadcast %696 : f32 to vector<8x128xf32>
    %698 = arith.mulf %54, %697 : vector<8x128xf32>
    %699 = arith.addf %695, %698 : vector<8x128xf32>
    %c76 = arith.constant 76 : index
    %700 = memref.load %arg3[%c76] : memref<200xf32, #tpu.memory_space<smem>>
    %701 = vector.broadcast %700 : f32 to vector<8x128xf32>
    %702 = arith.mulf %61, %701 : vector<8x128xf32>
    %703 = arith.addf %699, %702 : vector<8x128xf32>
    %c86 = arith.constant 86 : index
    %704 = memref.load %arg3[%c86] : memref<200xf32, #tpu.memory_space<smem>>
    %705 = vector.broadcast %704 : f32 to vector<8x128xf32>
    %706 = arith.mulf %68, %705 : vector<8x128xf32>
    %707 = arith.addf %703, %706 : vector<8x128xf32>
    %c96 = arith.constant 96 : index
    %708 = memref.load %arg3[%c96] : memref<200xf32, #tpu.memory_space<smem>>
    %709 = vector.broadcast %708 : f32 to vector<8x128xf32>
    %710 = arith.mulf %75, %709 : vector<8x128xf32>
    %711 = arith.addf %707, %710 : vector<8x128xf32>
    %c106 = arith.constant 106 : index
    %712 = memref.load %arg3[%c106] : memref<200xf32, #tpu.memory_space<smem>>
    %713 = vector.broadcast %712 : f32 to vector<8x128xf32>
    %714 = arith.mulf %82, %713 : vector<8x128xf32>
    %715 = arith.addf %711, %714 : vector<8x128xf32>
    %c116 = arith.constant 116 : index
    %716 = memref.load %arg3[%c116] : memref<200xf32, #tpu.memory_space<smem>>
    %717 = vector.broadcast %716 : f32 to vector<8x128xf32>
    %718 = arith.mulf %89, %717 : vector<8x128xf32>
    %719 = arith.addf %715, %718 : vector<8x128xf32>
    %c126 = arith.constant 126 : index
    %720 = memref.load %arg3[%c126] : memref<200xf32, #tpu.memory_space<smem>>
    %721 = vector.broadcast %720 : f32 to vector<8x128xf32>
    %722 = arith.mulf %96, %721 : vector<8x128xf32>
    %723 = arith.addf %719, %722 : vector<8x128xf32>
    %c136 = arith.constant 136 : index
    %724 = memref.load %arg3[%c136] : memref<200xf32, #tpu.memory_space<smem>>
    %725 = vector.broadcast %724 : f32 to vector<8x128xf32>
    %726 = arith.mulf %103, %725 : vector<8x128xf32>
    %727 = arith.addf %723, %726 : vector<8x128xf32>
    %c146 = arith.constant 146 : index
    %728 = memref.load %arg3[%c146] : memref<200xf32, #tpu.memory_space<smem>>
    %729 = vector.broadcast %728 : f32 to vector<8x128xf32>
    %730 = arith.mulf %110, %729 : vector<8x128xf32>
    %731 = arith.addf %727, %730 : vector<8x128xf32>
    %c156 = arith.constant 156 : index
    %732 = memref.load %arg3[%c156] : memref<200xf32, #tpu.memory_space<smem>>
    %733 = vector.broadcast %732 : f32 to vector<8x128xf32>
    %734 = arith.mulf %117, %733 : vector<8x128xf32>
    %735 = arith.addf %731, %734 : vector<8x128xf32>
    %c166 = arith.constant 166 : index
    %736 = memref.load %arg3[%c166] : memref<200xf32, #tpu.memory_space<smem>>
    %737 = vector.broadcast %736 : f32 to vector<8x128xf32>
    %738 = arith.mulf %124, %737 : vector<8x128xf32>
    %739 = arith.addf %735, %738 : vector<8x128xf32>
    %c176 = arith.constant 176 : index
    %740 = memref.load %arg3[%c176] : memref<200xf32, #tpu.memory_space<smem>>
    %741 = vector.broadcast %740 : f32 to vector<8x128xf32>
    %742 = arith.mulf %131, %741 : vector<8x128xf32>
    %743 = arith.addf %739, %742 : vector<8x128xf32>
    %c186 = arith.constant 186 : index
    %744 = memref.load %arg3[%c186] : memref<200xf32, #tpu.memory_space<smem>>
    %745 = vector.broadcast %744 : f32 to vector<8x128xf32>
    %746 = arith.mulf %138, %745 : vector<8x128xf32>
    %747 = arith.addf %743, %746 : vector<8x128xf32>
    %c196 = arith.constant 196 : index
    %748 = memref.load %arg3[%c196] : memref<200xf32, #tpu.memory_space<smem>>
    %749 = vector.broadcast %748 : f32 to vector<8x128xf32>
    %750 = arith.mulf %145, %749 : vector<8x128xf32>
    %751 = arith.addf %747, %750 : vector<8x128xf32>
    %752 = math.tanh %751 : vector<8x128xf32>
    %c6_50 = arith.constant 6 : index
    %753 = memref.load %arg5[%c6_50] : memref<10xf32, #tpu.memory_space<smem>>
    %754 = vector.broadcast %753 : f32 to vector<8x128xf32>
    %755 = arith.mulf %752, %754 : vector<8x128xf32>
    %756 = arith.addf %669, %755 : vector<8x128xf32>
    %c7_51 = arith.constant 7 : index
    %757 = memref.load %arg3[%c7_51] : memref<200xf32, #tpu.memory_space<smem>>
    %758 = vector.broadcast %757 : f32 to vector<8x128xf32>
    %759 = arith.mulf %12, %758 : vector<8x128xf32>
    %c7_52 = arith.constant 7 : index
    %760 = memref.load %arg4[%c7_52] : memref<10xf32, #tpu.memory_space<smem>>
    %761 = vector.broadcast %760 : f32 to vector<8x128xf32>
    %762 = arith.addf %759, %761 : vector<8x128xf32>
    %c17_53 = arith.constant 17 : index
    %763 = memref.load %arg3[%c17_53] : memref<200xf32, #tpu.memory_space<smem>>
    %764 = vector.broadcast %763 : f32 to vector<8x128xf32>
    %765 = arith.mulf %19, %764 : vector<8x128xf32>
    %766 = arith.addf %762, %765 : vector<8x128xf32>
    %c27 = arith.constant 27 : index
    %767 = memref.load %arg3[%c27] : memref<200xf32, #tpu.memory_space<smem>>
    %768 = vector.broadcast %767 : f32 to vector<8x128xf32>
    %769 = arith.mulf %26, %768 : vector<8x128xf32>
    %770 = arith.addf %766, %769 : vector<8x128xf32>
    %c37 = arith.constant 37 : index
    %771 = memref.load %arg3[%c37] : memref<200xf32, #tpu.memory_space<smem>>
    %772 = vector.broadcast %771 : f32 to vector<8x128xf32>
    %773 = arith.mulf %33, %772 : vector<8x128xf32>
    %774 = arith.addf %770, %773 : vector<8x128xf32>
    %c47 = arith.constant 47 : index
    %775 = memref.load %arg3[%c47] : memref<200xf32, #tpu.memory_space<smem>>
    %776 = vector.broadcast %775 : f32 to vector<8x128xf32>
    %777 = arith.mulf %40, %776 : vector<8x128xf32>
    %778 = arith.addf %774, %777 : vector<8x128xf32>
    %c57 = arith.constant 57 : index
    %779 = memref.load %arg3[%c57] : memref<200xf32, #tpu.memory_space<smem>>
    %780 = vector.broadcast %779 : f32 to vector<8x128xf32>
    %781 = arith.mulf %47, %780 : vector<8x128xf32>
    %782 = arith.addf %778, %781 : vector<8x128xf32>
    %c67 = arith.constant 67 : index
    %783 = memref.load %arg3[%c67] : memref<200xf32, #tpu.memory_space<smem>>
    %784 = vector.broadcast %783 : f32 to vector<8x128xf32>
    %785 = arith.mulf %54, %784 : vector<8x128xf32>
    %786 = arith.addf %782, %785 : vector<8x128xf32>
    %c77 = arith.constant 77 : index
    %787 = memref.load %arg3[%c77] : memref<200xf32, #tpu.memory_space<smem>>
    %788 = vector.broadcast %787 : f32 to vector<8x128xf32>
    %789 = arith.mulf %61, %788 : vector<8x128xf32>
    %790 = arith.addf %786, %789 : vector<8x128xf32>
    %c87 = arith.constant 87 : index
    %791 = memref.load %arg3[%c87] : memref<200xf32, #tpu.memory_space<smem>>
    %792 = vector.broadcast %791 : f32 to vector<8x128xf32>
    %793 = arith.mulf %68, %792 : vector<8x128xf32>
    %794 = arith.addf %790, %793 : vector<8x128xf32>
    %c97 = arith.constant 97 : index
    %795 = memref.load %arg3[%c97] : memref<200xf32, #tpu.memory_space<smem>>
    %796 = vector.broadcast %795 : f32 to vector<8x128xf32>
    %797 = arith.mulf %75, %796 : vector<8x128xf32>
    %798 = arith.addf %794, %797 : vector<8x128xf32>
    %c107 = arith.constant 107 : index
    %799 = memref.load %arg3[%c107] : memref<200xf32, #tpu.memory_space<smem>>
    %800 = vector.broadcast %799 : f32 to vector<8x128xf32>
    %801 = arith.mulf %82, %800 : vector<8x128xf32>
    %802 = arith.addf %798, %801 : vector<8x128xf32>
    %c117 = arith.constant 117 : index
    %803 = memref.load %arg3[%c117] : memref<200xf32, #tpu.memory_space<smem>>
    %804 = vector.broadcast %803 : f32 to vector<8x128xf32>
    %805 = arith.mulf %89, %804 : vector<8x128xf32>
    %806 = arith.addf %802, %805 : vector<8x128xf32>
    %c127 = arith.constant 127 : index
    %807 = memref.load %arg3[%c127] : memref<200xf32, #tpu.memory_space<smem>>
    %808 = vector.broadcast %807 : f32 to vector<8x128xf32>
    %809 = arith.mulf %96, %808 : vector<8x128xf32>
    %810 = arith.addf %806, %809 : vector<8x128xf32>
    %c137 = arith.constant 137 : index
    %811 = memref.load %arg3[%c137] : memref<200xf32, #tpu.memory_space<smem>>
    %812 = vector.broadcast %811 : f32 to vector<8x128xf32>
    %813 = arith.mulf %103, %812 : vector<8x128xf32>
    %814 = arith.addf %810, %813 : vector<8x128xf32>
    %c147 = arith.constant 147 : index
    %815 = memref.load %arg3[%c147] : memref<200xf32, #tpu.memory_space<smem>>
    %816 = vector.broadcast %815 : f32 to vector<8x128xf32>
    %817 = arith.mulf %110, %816 : vector<8x128xf32>
    %818 = arith.addf %814, %817 : vector<8x128xf32>
    %c157 = arith.constant 157 : index
    %819 = memref.load %arg3[%c157] : memref<200xf32, #tpu.memory_space<smem>>
    %820 = vector.broadcast %819 : f32 to vector<8x128xf32>
    %821 = arith.mulf %117, %820 : vector<8x128xf32>
    %822 = arith.addf %818, %821 : vector<8x128xf32>
    %c167 = arith.constant 167 : index
    %823 = memref.load %arg3[%c167] : memref<200xf32, #tpu.memory_space<smem>>
    %824 = vector.broadcast %823 : f32 to vector<8x128xf32>
    %825 = arith.mulf %124, %824 : vector<8x128xf32>
    %826 = arith.addf %822, %825 : vector<8x128xf32>
    %c177 = arith.constant 177 : index
    %827 = memref.load %arg3[%c177] : memref<200xf32, #tpu.memory_space<smem>>
    %828 = vector.broadcast %827 : f32 to vector<8x128xf32>
    %829 = arith.mulf %131, %828 : vector<8x128xf32>
    %830 = arith.addf %826, %829 : vector<8x128xf32>
    %c187 = arith.constant 187 : index
    %831 = memref.load %arg3[%c187] : memref<200xf32, #tpu.memory_space<smem>>
    %832 = vector.broadcast %831 : f32 to vector<8x128xf32>
    %833 = arith.mulf %138, %832 : vector<8x128xf32>
    %834 = arith.addf %830, %833 : vector<8x128xf32>
    %c197 = arith.constant 197 : index
    %835 = memref.load %arg3[%c197] : memref<200xf32, #tpu.memory_space<smem>>
    %836 = vector.broadcast %835 : f32 to vector<8x128xf32>
    %837 = arith.mulf %145, %836 : vector<8x128xf32>
    %838 = arith.addf %834, %837 : vector<8x128xf32>
    %839 = math.tanh %838 : vector<8x128xf32>
    %c7_54 = arith.constant 7 : index
    %840 = memref.load %arg5[%c7_54] : memref<10xf32, #tpu.memory_space<smem>>
    %841 = vector.broadcast %840 : f32 to vector<8x128xf32>
    %842 = arith.mulf %839, %841 : vector<8x128xf32>
    %843 = arith.addf %756, %842 : vector<8x128xf32>
    %c8_55 = arith.constant 8 : index
    %844 = memref.load %arg3[%c8_55] : memref<200xf32, #tpu.memory_space<smem>>
    %845 = vector.broadcast %844 : f32 to vector<8x128xf32>
    %846 = arith.mulf %12, %845 : vector<8x128xf32>
    %c8_56 = arith.constant 8 : index
    %847 = memref.load %arg4[%c8_56] : memref<10xf32, #tpu.memory_space<smem>>
    %848 = vector.broadcast %847 : f32 to vector<8x128xf32>
    %849 = arith.addf %846, %848 : vector<8x128xf32>
    %c18_57 = arith.constant 18 : index
    %850 = memref.load %arg3[%c18_57] : memref<200xf32, #tpu.memory_space<smem>>
    %851 = vector.broadcast %850 : f32 to vector<8x128xf32>
    %852 = arith.mulf %19, %851 : vector<8x128xf32>
    %853 = arith.addf %849, %852 : vector<8x128xf32>
    %c28 = arith.constant 28 : index
    %854 = memref.load %arg3[%c28] : memref<200xf32, #tpu.memory_space<smem>>
    %855 = vector.broadcast %854 : f32 to vector<8x128xf32>
    %856 = arith.mulf %26, %855 : vector<8x128xf32>
    %857 = arith.addf %853, %856 : vector<8x128xf32>
    %c38 = arith.constant 38 : index
    %858 = memref.load %arg3[%c38] : memref<200xf32, #tpu.memory_space<smem>>
    %859 = vector.broadcast %858 : f32 to vector<8x128xf32>
    %860 = arith.mulf %33, %859 : vector<8x128xf32>
    %861 = arith.addf %857, %860 : vector<8x128xf32>
    %c48 = arith.constant 48 : index
    %862 = memref.load %arg3[%c48] : memref<200xf32, #tpu.memory_space<smem>>
    %863 = vector.broadcast %862 : f32 to vector<8x128xf32>
    %864 = arith.mulf %40, %863 : vector<8x128xf32>
    %865 = arith.addf %861, %864 : vector<8x128xf32>
    %c58 = arith.constant 58 : index
    %866 = memref.load %arg3[%c58] : memref<200xf32, #tpu.memory_space<smem>>
    %867 = vector.broadcast %866 : f32 to vector<8x128xf32>
    %868 = arith.mulf %47, %867 : vector<8x128xf32>
    %869 = arith.addf %865, %868 : vector<8x128xf32>
    %c68 = arith.constant 68 : index
    %870 = memref.load %arg3[%c68] : memref<200xf32, #tpu.memory_space<smem>>
    %871 = vector.broadcast %870 : f32 to vector<8x128xf32>
    %872 = arith.mulf %54, %871 : vector<8x128xf32>
    %873 = arith.addf %869, %872 : vector<8x128xf32>
    %c78 = arith.constant 78 : index
    %874 = memref.load %arg3[%c78] : memref<200xf32, #tpu.memory_space<smem>>
    %875 = vector.broadcast %874 : f32 to vector<8x128xf32>
    %876 = arith.mulf %61, %875 : vector<8x128xf32>
    %877 = arith.addf %873, %876 : vector<8x128xf32>
    %c88 = arith.constant 88 : index
    %878 = memref.load %arg3[%c88] : memref<200xf32, #tpu.memory_space<smem>>
    %879 = vector.broadcast %878 : f32 to vector<8x128xf32>
    %880 = arith.mulf %68, %879 : vector<8x128xf32>
    %881 = arith.addf %877, %880 : vector<8x128xf32>
    %c98 = arith.constant 98 : index
    %882 = memref.load %arg3[%c98] : memref<200xf32, #tpu.memory_space<smem>>
    %883 = vector.broadcast %882 : f32 to vector<8x128xf32>
    %884 = arith.mulf %75, %883 : vector<8x128xf32>
    %885 = arith.addf %881, %884 : vector<8x128xf32>
    %c108 = arith.constant 108 : index
    %886 = memref.load %arg3[%c108] : memref<200xf32, #tpu.memory_space<smem>>
    %887 = vector.broadcast %886 : f32 to vector<8x128xf32>
    %888 = arith.mulf %82, %887 : vector<8x128xf32>
    %889 = arith.addf %885, %888 : vector<8x128xf32>
    %c118 = arith.constant 118 : index
    %890 = memref.load %arg3[%c118] : memref<200xf32, #tpu.memory_space<smem>>
    %891 = vector.broadcast %890 : f32 to vector<8x128xf32>
    %892 = arith.mulf %89, %891 : vector<8x128xf32>
    %893 = arith.addf %889, %892 : vector<8x128xf32>
    %c128 = arith.constant 128 : index
    %894 = memref.load %arg3[%c128] : memref<200xf32, #tpu.memory_space<smem>>
    %895 = vector.broadcast %894 : f32 to vector<8x128xf32>
    %896 = arith.mulf %96, %895 : vector<8x128xf32>
    %897 = arith.addf %893, %896 : vector<8x128xf32>
    %c138 = arith.constant 138 : index
    %898 = memref.load %arg3[%c138] : memref<200xf32, #tpu.memory_space<smem>>
    %899 = vector.broadcast %898 : f32 to vector<8x128xf32>
    %900 = arith.mulf %103, %899 : vector<8x128xf32>
    %901 = arith.addf %897, %900 : vector<8x128xf32>
    %c148 = arith.constant 148 : index
    %902 = memref.load %arg3[%c148] : memref<200xf32, #tpu.memory_space<smem>>
    %903 = vector.broadcast %902 : f32 to vector<8x128xf32>
    %904 = arith.mulf %110, %903 : vector<8x128xf32>
    %905 = arith.addf %901, %904 : vector<8x128xf32>
    %c158 = arith.constant 158 : index
    %906 = memref.load %arg3[%c158] : memref<200xf32, #tpu.memory_space<smem>>
    %907 = vector.broadcast %906 : f32 to vector<8x128xf32>
    %908 = arith.mulf %117, %907 : vector<8x128xf32>
    %909 = arith.addf %905, %908 : vector<8x128xf32>
    %c168 = arith.constant 168 : index
    %910 = memref.load %arg3[%c168] : memref<200xf32, #tpu.memory_space<smem>>
    %911 = vector.broadcast %910 : f32 to vector<8x128xf32>
    %912 = arith.mulf %124, %911 : vector<8x128xf32>
    %913 = arith.addf %909, %912 : vector<8x128xf32>
    %c178 = arith.constant 178 : index
    %914 = memref.load %arg3[%c178] : memref<200xf32, #tpu.memory_space<smem>>
    %915 = vector.broadcast %914 : f32 to vector<8x128xf32>
    %916 = arith.mulf %131, %915 : vector<8x128xf32>
    %917 = arith.addf %913, %916 : vector<8x128xf32>
    %c188 = arith.constant 188 : index
    %918 = memref.load %arg3[%c188] : memref<200xf32, #tpu.memory_space<smem>>
    %919 = vector.broadcast %918 : f32 to vector<8x128xf32>
    %920 = arith.mulf %138, %919 : vector<8x128xf32>
    %921 = arith.addf %917, %920 : vector<8x128xf32>
    %c198 = arith.constant 198 : index
    %922 = memref.load %arg3[%c198] : memref<200xf32, #tpu.memory_space<smem>>
    %923 = vector.broadcast %922 : f32 to vector<8x128xf32>
    %924 = arith.mulf %145, %923 : vector<8x128xf32>
    %925 = arith.addf %921, %924 : vector<8x128xf32>
    %926 = math.tanh %925 : vector<8x128xf32>
    %c8_58 = arith.constant 8 : index
    %927 = memref.load %arg5[%c8_58] : memref<10xf32, #tpu.memory_space<smem>>
    %928 = vector.broadcast %927 : f32 to vector<8x128xf32>
    %929 = arith.mulf %926, %928 : vector<8x128xf32>
    %930 = arith.addf %843, %929 : vector<8x128xf32>
    %c9_59 = arith.constant 9 : index
    %931 = memref.load %arg3[%c9_59] : memref<200xf32, #tpu.memory_space<smem>>
    %932 = vector.broadcast %931 : f32 to vector<8x128xf32>
    %933 = arith.mulf %12, %932 : vector<8x128xf32>
    %c9_60 = arith.constant 9 : index
    %934 = memref.load %arg4[%c9_60] : memref<10xf32, #tpu.memory_space<smem>>
    %935 = vector.broadcast %934 : f32 to vector<8x128xf32>
    %936 = arith.addf %933, %935 : vector<8x128xf32>
    %c19_61 = arith.constant 19 : index
    %937 = memref.load %arg3[%c19_61] : memref<200xf32, #tpu.memory_space<smem>>
    %938 = vector.broadcast %937 : f32 to vector<8x128xf32>
    %939 = arith.mulf %19, %938 : vector<8x128xf32>
    %940 = arith.addf %936, %939 : vector<8x128xf32>
    %c29 = arith.constant 29 : index
    %941 = memref.load %arg3[%c29] : memref<200xf32, #tpu.memory_space<smem>>
    %942 = vector.broadcast %941 : f32 to vector<8x128xf32>
    %943 = arith.mulf %26, %942 : vector<8x128xf32>
    %944 = arith.addf %940, %943 : vector<8x128xf32>
    %c39 = arith.constant 39 : index
    %945 = memref.load %arg3[%c39] : memref<200xf32, #tpu.memory_space<smem>>
    %946 = vector.broadcast %945 : f32 to vector<8x128xf32>
    %947 = arith.mulf %33, %946 : vector<8x128xf32>
    %948 = arith.addf %944, %947 : vector<8x128xf32>
    %c49 = arith.constant 49 : index
    %949 = memref.load %arg3[%c49] : memref<200xf32, #tpu.memory_space<smem>>
    %950 = vector.broadcast %949 : f32 to vector<8x128xf32>
    %951 = arith.mulf %40, %950 : vector<8x128xf32>
    %952 = arith.addf %948, %951 : vector<8x128xf32>
    %c59 = arith.constant 59 : index
    %953 = memref.load %arg3[%c59] : memref<200xf32, #tpu.memory_space<smem>>
    %954 = vector.broadcast %953 : f32 to vector<8x128xf32>
    %955 = arith.mulf %47, %954 : vector<8x128xf32>
    %956 = arith.addf %952, %955 : vector<8x128xf32>
    %c69 = arith.constant 69 : index
    %957 = memref.load %arg3[%c69] : memref<200xf32, #tpu.memory_space<smem>>
    %958 = vector.broadcast %957 : f32 to vector<8x128xf32>
    %959 = arith.mulf %54, %958 : vector<8x128xf32>
    %960 = arith.addf %956, %959 : vector<8x128xf32>
    %c79 = arith.constant 79 : index
    %961 = memref.load %arg3[%c79] : memref<200xf32, #tpu.memory_space<smem>>
    %962 = vector.broadcast %961 : f32 to vector<8x128xf32>
    %963 = arith.mulf %61, %962 : vector<8x128xf32>
    %964 = arith.addf %960, %963 : vector<8x128xf32>
    %c89 = arith.constant 89 : index
    %965 = memref.load %arg3[%c89] : memref<200xf32, #tpu.memory_space<smem>>
    %966 = vector.broadcast %965 : f32 to vector<8x128xf32>
    %967 = arith.mulf %68, %966 : vector<8x128xf32>
    %968 = arith.addf %964, %967 : vector<8x128xf32>
    %c99 = arith.constant 99 : index
    %969 = memref.load %arg3[%c99] : memref<200xf32, #tpu.memory_space<smem>>
    %970 = vector.broadcast %969 : f32 to vector<8x128xf32>
    %971 = arith.mulf %75, %970 : vector<8x128xf32>
    %972 = arith.addf %968, %971 : vector<8x128xf32>
    %c109 = arith.constant 109 : index
    %973 = memref.load %arg3[%c109] : memref<200xf32, #tpu.memory_space<smem>>
    %974 = vector.broadcast %973 : f32 to vector<8x128xf32>
    %975 = arith.mulf %82, %974 : vector<8x128xf32>
    %976 = arith.addf %972, %975 : vector<8x128xf32>
    %c119 = arith.constant 119 : index
    %977 = memref.load %arg3[%c119] : memref<200xf32, #tpu.memory_space<smem>>
    %978 = vector.broadcast %977 : f32 to vector<8x128xf32>
    %979 = arith.mulf %89, %978 : vector<8x128xf32>
    %980 = arith.addf %976, %979 : vector<8x128xf32>
    %c129 = arith.constant 129 : index
    %981 = memref.load %arg3[%c129] : memref<200xf32, #tpu.memory_space<smem>>
    %982 = vector.broadcast %981 : f32 to vector<8x128xf32>
    %983 = arith.mulf %96, %982 : vector<8x128xf32>
    %984 = arith.addf %980, %983 : vector<8x128xf32>
    %c139 = arith.constant 139 : index
    %985 = memref.load %arg3[%c139] : memref<200xf32, #tpu.memory_space<smem>>
    %986 = vector.broadcast %985 : f32 to vector<8x128xf32>
    %987 = arith.mulf %103, %986 : vector<8x128xf32>
    %988 = arith.addf %984, %987 : vector<8x128xf32>
    %c149 = arith.constant 149 : index
    %989 = memref.load %arg3[%c149] : memref<200xf32, #tpu.memory_space<smem>>
    %990 = vector.broadcast %989 : f32 to vector<8x128xf32>
    %991 = arith.mulf %110, %990 : vector<8x128xf32>
    %992 = arith.addf %988, %991 : vector<8x128xf32>
    %c159 = arith.constant 159 : index
    %993 = memref.load %arg3[%c159] : memref<200xf32, #tpu.memory_space<smem>>
    %994 = vector.broadcast %993 : f32 to vector<8x128xf32>
    %995 = arith.mulf %117, %994 : vector<8x128xf32>
    %996 = arith.addf %992, %995 : vector<8x128xf32>
    %c169 = arith.constant 169 : index
    %997 = memref.load %arg3[%c169] : memref<200xf32, #tpu.memory_space<smem>>
    %998 = vector.broadcast %997 : f32 to vector<8x128xf32>
    %999 = arith.mulf %124, %998 : vector<8x128xf32>
    %1000 = arith.addf %996, %999 : vector<8x128xf32>
    %c179 = arith.constant 179 : index
    %1001 = memref.load %arg3[%c179] : memref<200xf32, #tpu.memory_space<smem>>
    %1002 = vector.broadcast %1001 : f32 to vector<8x128xf32>
    %1003 = arith.mulf %131, %1002 : vector<8x128xf32>
    %1004 = arith.addf %1000, %1003 : vector<8x128xf32>
    %c189 = arith.constant 189 : index
    %1005 = memref.load %arg3[%c189] : memref<200xf32, #tpu.memory_space<smem>>
    %1006 = vector.broadcast %1005 : f32 to vector<8x128xf32>
    %1007 = arith.mulf %138, %1006 : vector<8x128xf32>
    %1008 = arith.addf %1004, %1007 : vector<8x128xf32>
    %c199 = arith.constant 199 : index
    %1009 = memref.load %arg3[%c199] : memref<200xf32, #tpu.memory_space<smem>>
    %1010 = vector.broadcast %1009 : f32 to vector<8x128xf32>
    %1011 = arith.mulf %145, %1010 : vector<8x128xf32>
    %1012 = arith.addf %1008, %1011 : vector<8x128xf32>
    %1013 = math.tanh %1012 : vector<8x128xf32>
    %c9_62 = arith.constant 9 : index
    %1014 = memref.load %arg5[%c9_62] : memref<10xf32, #tpu.memory_space<smem>>
    %1015 = vector.broadcast %1014 : f32 to vector<8x128xf32>
    %1016 = arith.mulf %1013, %1015 : vector<8x128xf32>
    %1017 = arith.addf %930, %1016 : vector<8x128xf32>
    %1018 = arith.index_cast %3 : i32 to index
    %c0_63 = arith.constant 0 : index
    %1019 = vector.load %arg8[%1018, %c0_63] : memref<8x128xf32, #tpu.memory_space<vmem>>, vector<8x128xf32>
    tpu.vector_store %arg8[%1018, %c0_63], %1017 {strides = array<i32>} : memref<8x128xf32, #tpu.memory_space<vmem>>, vector<8x128xf32>,
    %c1_i32_64 = arith.constant 1 : i32
    return
  }
  func.func @transform_0(%arg0: i32) -> i32 {
    %c0_i32 = arith.constant 0 : i32
    %c0_i32_0 = arith.constant 0 : i32
    return %c0_i32 : i32
  }
  func.func @transform_1(%arg0: i32) -> i32 {
    %c0_i32 = arith.constant 0 : i32
    %c0_i32_0 = arith.constant 0 : i32
    return %c0_i32 : i32
  }
  func.func @transform_2(%arg0: i32) -> i32 {
    %c0_i32 = arith.constant 0 : i32
    %c0_i32_0 = arith.constant 0 : i32
    return %c0_i32 : i32
  }
  func.func @transform_3(%arg0: i32) -> i32 {
    %c0_i32 = arith.constant 0 : i32
    %c0_i32_0 = arith.constant 0 : i32
    return %c0_i32 : i32
  }
  func.func @transform_4(%arg0: i32) -> i32 {
    %c0_i32 = arith.constant 0 : i32
    %c0_i32_0 = arith.constant 0 : i32
    return %c0_i32 : i32
  }
  func.func @transform_5(%arg0: i32) -> i32 {
    %c0_i32 = arith.constant 0 : i32
    %c0_i32_0 = arith.constant 0 : i32
    return %c0_i32 : i32
  }
  func.func @transform_6(%arg0: i32) -> (i32, i32) {
    %c0_i32 = arith.constant 0 : i32
    %c0_i32_0 = arith.constant 0 : i32
    return %arg0, %c0_i32 : i32, i32
  }
  func.func @transform_7(%arg0: i32) -> (i32, i32) {
    %c0_i32 = arith.constant 0 : i32
    %c0_i32_0 = arith.constant 0 : i32
    return %arg0, %c0_i32 : i32, i32
  }
}

</mosaic_0001>

<llo_original>
// kernel: learned_fn.1
$region0: #{learned_fn.1}
  #allocation0 [shape = 'u32[]', space=smem, size = 0x4, offset = 0x4, fixed_abs, tag = 'smem constant byte address 0x4 - core index']
  #allocation1 [shape = 'u32[72,128]{1,0:T(1,128)}', space=vmem, size = 0x9000, scoped, tag = 'internal scratch']
  #allocation2 [shape = 'f32[1]{0:T(128)S(6)}', space=smem, size = 0x200, scoped, tag = 'scoped memory for learned_fn.1']
  %s0 = inlined_call_operand.vmem [shape: f32[20], index: 0, kind: input, shape index: {}]
  %s1 = inlined_call_operand.vmem [shape: f32[20], index: 1, kind: input, shape index: {}]
  %s2 = inlined_call_operand.vmem [shape: f32[200], index: 2, kind: input, shape index: {}]
  %s3 = inlined_call_operand.vmem [shape: f32[10], index: 3, kind: input, shape index: {}]
  %s4 = inlined_call_operand.vmem [shape: f32[10], index: 4, kind: input, shape index: {}]
  %s5 = inlined_call_operand.<no memory space> [shape: f32[1], index: 5, kind: input, shape index: {}]
  %s6 = inlined_call_operand.vmem [shape: f32[8,128], index: 6, kind: input, shape index: {}]
  %s7 = inlined_call_operand.vmem [shape: f32[8,128], index: 7, kind: output, shape index: {}]
  %s8 = sld [smem:[#allocation0]]
  $region58: #{learned_fn.1} parent=0
    _
  %s10 = ssub.s32 1, %s8
  %s11 = scalar_select 0, %s10, %s8
  %12 = sst [smem:[#allocation2]] %s5
  $region1: #{learned_fn.1} parent=0
    #allocation3 [shape = 'u8[512]{0}', space=smem, size = 0x200, scoped, tag = 'input window, operand 0, single buffered']
    #allocation4 [shape = 's32[1]{0}', space=sflag, size = 0x4, scoped, tag = 'scoped memory for learned_fn.1']
    #allocation5 [shape = 'u8[512]{0}', space=smem, size = 0x200, scoped, tag = 'input window, operand 1, single buffered']
    #allocation6 [shape = 's32[1]{0}', space=sflag, size = 0x4, scoped, tag = 'scoped memory for learned_fn.1']
    #allocation7 [shape = 'u8[1024]{0}', space=smem, size = 0x400, scoped, tag = 'input window, operand 2, single buffered']
    #allocation8 [shape = 'u8[512]{0}', space=smem, size = 0x200, scoped, tag = 'input window, operand 3, single buffered']
    #allocation9 [shape = 's32[1]{0}', space=sflag, size = 0x4, scoped, tag = 'scoped memory for learned_fn.1']
    #allocation10 [shape = 'u8[512]{0}', space=smem, size = 0x200, scoped, tag = 'input window, operand 4, single buffered']
    %13 = vsyncpa [#allocation4], 0
    %14 = vsyncpa [#allocation6], 0
    %15 = vsyncpa [#allocation9], 0
    // Predicated region
    $region2: #{learned_fn.1} parent=1 // pred_check
      _
    $region3: #{learned_fn.1} parent=1 // pred_check_branch
      %17 = sbr.rel (0) target = $region5
    $region4: #{learned_fn.1} parent=1 // pred_region
      %19 = vsyncadd [#allocation4], 0
      %s21 = sshll.u32 %s0, 4
      %s22 = int_to_ptr.vmem [resolvable:$true] %s21
      %24 = dma.vmem_to_smem %s22, 16, [#allocation3], [#allocation4]
    $region5: #{learned_fn.1} parent=1 // pred_fallthru
      _
    // Predicated region
    $region6: #{learned_fn.1} parent=1 // pred_check
      _
    $region7: #{learned_fn.1} parent=1 // pred_check_branch
      %26 = sbr.rel (0) target = $region9
    $region8: #{learned_fn.1} parent=1 // pred_region
      %28 = vsyncadd [#allocation6], 0
      %s30 = sshll.u32 %s1, 4
      %s31 = int_to_ptr.vmem [resolvable:$true] %s30
      %33 = dma.vmem_to_smem %s31, 16, [#allocation5], [#allocation6]
    $region9: #{learned_fn.1} parent=1 // pred_fallthru
      _
    // Predicated region
    $region10: #{learned_fn.1} parent=1 // pred_check
      _
    $region11: #{learned_fn.1} parent=1 // pred_check_branch
      %35 = sbr.rel (0) target = $region13
    $region12: #{learned_fn.1} parent=1 // pred_region
      %37 = vsyncadd [#allocation6], 0
      %s39 = sshll.u32 %s2, 4
      %s40 = int_to_ptr.vmem [resolvable:$true] %s39
      %42 = dma.vmem_to_smem %s40, 32, [#allocation7], [#allocation6]
    $region13: #{learned_fn.1} parent=1 // pred_fallthru
      _
    // Predicated region
    $region14: #{learned_fn.1} parent=1 // pred_check
      _
    $region15: #{learned_fn.1} parent=1 // pred_check_branch
      %44 = sbr.rel (0) target = $region17
    $region16: #{learned_fn.1} parent=1 // pred_region
      %46 = vsyncadd [#allocation9], 0
      %s48 = sshll.u32 %s3, 4
      %s49 = int_to_ptr.vmem [resolvable:$true] %s48
      %51 = dma.vmem_to_smem %s49, 16, [#allocation8], [#allocation9]
    $region17: #{learned_fn.1} parent=1 // pred_fallthru
      _
    // Predicated region
    $region18: #{learned_fn.1} parent=1 // pred_check
      _
    $region19: #{learned_fn.1} parent=1 // pred_check_branch
      %53 = sbr.rel (0) target = $region21
    $region20: #{learned_fn.1} parent=1 // pred_region
      %55 = vsyncadd [#allocation9], 0
      %s57 = sshll.u32 %s4, 4
      %s58 = int_to_ptr.vmem [resolvable:$true] %s57
      %60 = dma.vmem_to_smem %s58, 16, [#allocation10], [#allocation9]
    $region21: #{learned_fn.1} parent=1 // pred_fallthru
      _
    // Predicated region
    $region22: #{learned_fn.1} parent=1 // pred_check
      _
    $region23: #{learned_fn.1} parent=1 // pred_check_branch
      %62 = sbr.rel (0) target = $region25
    $region24: #{learned_fn.1} parent=1 // pred_region
      _
    $region25: #{learned_fn.1} parent=1 // pred_fallthru
      _
    // Predicated region
    $region26: #{learned_fn.1} parent=1 // pred_check
      _
    $region27: #{learned_fn.1} parent=1 // pred_check_branch
      %64 = sbr.rel (0) target = $region29
    $region28: #{learned_fn.1} parent=1 // pred_region
      _
    $region29: #{learned_fn.1} parent=1 // pred_fallthru
      _
    // Predicated region
    $region30: #{learned_fn.1} parent=1 // pred_check
      _
    $region31: #{learned_fn.1} parent=1 // pred_check_branch
      %66 = sbr.rel (0) target = $region33
    $region32: #{learned_fn.1} parent=1 // pred_region
      %68 = dma.done [#allocation4], 16
    $region33: #{learned_fn.1} parent=1 // pred_fallthru
      _
    // Predicated region
    $region34: #{learned_fn.1} parent=1 // pred_check
      _
    $region35: #{learned_fn.1} parent=1 // pred_check_branch
      %70 = sbr.rel (0) target = $region37
    $region36: #{learned_fn.1} parent=1 // pred_region
      %72 = dma.done [#allocation6], 16
    $region37: #{learned_fn.1} parent=1 // pred_fallthru
      _
    // Predicated region
    $region38: #{learned_fn.1} parent=1 // pred_check
      _
    $region39: #{learned_fn.1} parent=1 // pred_check_branch
      %74 = sbr.rel (0) target = $region41
    $region40: #{learned_fn.1} parent=1 // pred_region
      %76 = dma.done [#allocation6], 32
    $region41: #{learned_fn.1} parent=1 // pred_fallthru
      _
    // Predicated region
    $region42: #{learned_fn.1} parent=1 // pred_check
      _
    $region43: #{learned_fn.1} parent=1 // pred_check_branch
      %78 = sbr.rel (0) target = $region45
    $region44: #{learned_fn.1} parent=1 // pred_region
      %80 = dma.done [#allocation9], 16
    $region45: #{learned_fn.1} parent=1 // pred_fallthru
      _
    // Predicated region
    $region46: #{learned_fn.1} parent=1 // pred_check
      _
    $region47: #{learned_fn.1} parent=1 // pred_check_branch
      %82 = sbr.rel (0) target = $region49
    $region48: #{learned_fn.1} parent=1 // pred_region
      %84 = dma.done [#allocation9], 16
    $region49: #{learned_fn.1} parent=1 // pred_fallthru
      _
    %85 = sfence
    %v86 = vld [vmem:[%s6] sm:$0xff]
    %s87 = sld [smem:[#allocation3]]
    %v88 = vstv %s87
    %v89 = vmul.f32 %v86, %v88
    %s90 = sld [smem:[#allocation5]]
    %v91 = vstv %s90
    %v92 = vadd.f32 %v89, %v91
    %v93 = vtanh.pop %v92
    %s94 = sld [smem:[#allocation3 + $0x1]]
    %v95 = vstv %s94
    %v96 = vmul.f32 %v86, %v95
    %s97 = sld [smem:[#allocation5 + $0x1]]
    %v98 = vstv %s97
    %v99 = vadd.f32 %v96, %v98
    %v100 = vtanh.pop %v99
    %s101 = sld [smem:[#allocation3 + $0x2]]
    %v102 = vstv %s101
    %v103 = vmul.f32 %v86, %v102
    %s104 = sld [smem:[#allocation5 + $0x2]]
    %v105 = vstv %s104
    %v106 = vadd.f32 %v103, %v105
    %v107 = vtanh.pop %v106
    %s108 = sld [smem:[#allocation3 + $0x3]]
    %v109 = vstv %s108
    %v110 = vmul.f32 %v86, %v109
    %s111 = sld [smem:[#allocation5 + $0x3]]
    %v112 = vstv %s111
    %v113 = vadd.f32 %v110, %v112
    %v114 = vtanh.pop %v113
    %s115 = sld [smem:[#allocation3 + $0x4]]
    %v116 = vstv %s115
    %v117 = vmul.f32 %v86, %v116
    %s118 = sld [smem:[#allocation5 + $0x4]]
    %v119 = vstv %s118
    %v120 = vadd.f32 %v117, %v119
    %v121 = vtanh.pop %v120
    %s122 = sld [smem:[#allocation3 + $0x5]]
    %v123 = vstv %s122
    %v124 = vmul.f32 %v86, %v123
    %s125 = sld [smem:[#allocation5 + $0x5]]
    %v126 = vstv %s125
    %v127 = vadd.f32 %v124, %v126
    %v128 = vtanh.pop %v127
    %s129 = sld [smem:[#allocation3 + $0x6]]
    %v130 = vstv %s129
    %v131 = vmul.f32 %v86, %v130
    %s132 = sld [smem:[#allocation5 + $0x6]]
    %v133 = vstv %s132
    %v134 = vadd.f32 %v131, %v133
    %v135 = vtanh.pop %v134
    %s136 = sld [smem:[#allocation3 + $0x7]]
    %v137 = vstv %s136
    %v138 = vmul.f32 %v86, %v137
    %s139 = sld [smem:[#allocation5 + $0x7]]
    %v140 = vstv %s139
    %v141 = vadd.f32 %v138, %v140
    %v142 = vtanh.pop %v141
    %s143 = sld [smem:[#allocation3 + $0x8]]
    %v144 = vstv %s143
    %v145 = vmul.f32 %v86, %v144
    %s146 = sld [smem:[#allocation5 + $0x8]]
    %v147 = vstv %s146
    %v148 = vadd.f32 %v145, %v147
    %v149 = vtanh.pop %v148
    %s150 = sld [smem:[#allocation3 + $0x9]]
    %v151 = vstv %s150
    %v152 = vmul.f32 %v86, %v151
    %s153 = sld [smem:[#allocation5 + $0x9]]
    %v154 = vstv %s153
    %v155 = vadd.f32 %v152, %v154
    %v156 = vtanh.pop %v155
    %s157 = sld [smem:[#allocation3 + $0xa]]
    %v158 = vstv %s157
    %v159 = vmul.f32 %v86, %v158
    %s160 = sld [smem:[#allocation5 + $0xa]]
    %v161 = vstv %s160
    %v162 = vadd.f32 %v159, %v161
    %v163 = vtanh.pop %v162
    %s164 = sld [smem:[#allocation3 + $0xb]]
    %v165 = vstv %s164
    %v166 = vmul.f32 %v86, %v165
    %s167 = sld [smem:[#allocation5 + $0xb]]
    %v168 = vstv %s167
    %v169 = vadd.f32 %v166, %v168
    %v170 = vtanh.pop %v169
    %s171 = sld [smem:[#allocation3 + $0xc]]
    %v172 = vstv %s171
    %v173 = vmul.f32 %v86, %v172
    %s174 = sld [smem:[#allocation5 + $0xc]]
    %v175 = vstv %s174
    %v176 = vadd.f32 %v173, %v175
    %v177 = vtanh.pop %v176
    %s178 = sld [smem:[#allocation3 + $0xd]]
    %v179 = vstv %s178
    %v180 = vmul.f32 %v86, %v179
    %s181 = sld [smem:[#allocation5 + $0xd]]
    %v182 = vstv %s181
    %v183 = vadd.f32 %v180, %v182
    %v184 = vtanh.pop %v183
    %s185 = sld [smem:[#allocation3 + $0xe]]
    %v186 = vstv %s185
    %v187 = vmul.f32 %v86, %v186
    %s188 = sld [smem:[#allocation5 + $0xe]]
    %v189 = vstv %s188
    %v190 = vadd.f32 %v187, %v189
    %v191 = vtanh.pop %v190
    %s192 = sld [smem:[#allocation3 + $0xf]]
    %v193 = vstv %s192
    %v194 = vmul.f32 %v86, %v193
    %s195 = sld [smem:[#allocation5 + $0xf]]
    %v196 = vstv %s195
    %v197 = vadd.f32 %v194, %v196
    %v198 = vtanh.pop %v197
    %s199 = sld [smem:[#allocation3 + $0x10]]
    %v200 = vstv %s199
    %v201 = vmul.f32 %v86, %v200
    %s202 = sld [smem:[#allocation5 + $0x10]]
    %v203 = vstv %s202
    %v204 = vadd.f32 %v201, %v203
    %v205 = vtanh.pop %v204
    %s206 = sld [smem:[#allocation3 + $0x11]]
    %v207 = vstv %s206
    %v208 = vmul.f32 %v86, %v207
    %s209 = sld [smem:[#allocation5 + $0x11]]
    %v210 = vstv %s209
    %v211 = vadd.f32 %v208, %v210
    %v212 = vtanh.pop %v211
    %s213 = sld [smem:[#allocation3 + $0x12]]
    %v214 = vstv %s213
    %v215 = vmul.f32 %v86, %v214
    %s216 = sld [smem:[#allocation5 + $0x12]]
    %v217 = vstv %s216
    %v218 = vadd.f32 %v215, %v217
    %v219 = vtanh.pop %v218
    %s220 = sld [smem:[#allocation3 + $0x13]]
    %v221 = vstv %s220
    %v222 = vmul.f32 %v86, %v221
    %s223 = sld [smem:[#allocation5 + $0x13]]
    %v224 = vstv %s223
    %v225 = vadd.f32 %v222, %v224
    %v226 = vtanh.pop %v225
    %s227 = sld [smem:[#allocation7]]
    %v228 = vstv %s227
    %v229 = vmul.f32 %v93, %v228
    %s230 = sld [smem:[#allocation8]]
    %v231 = vstv %s230
    %v232 = vadd.f32 %v229, %v231
    %s233 = sld [smem:[#allocation7 + $0xa]]
    %v234 = vstv %s233
    %v235 = vmul.f32 %v100, %v234
    %v236 = vadd.f32 %v232, %v235
    %s237 = sld [smem:[#allocation7 + $0x14]]
    %v238 = vstv %s237
    %v239 = vmul.f32 %v107, %v238
    %v240 = vadd.f32 %v236, %v239
    %s241 = sld [smem:[#allocation7 + $0x1e]]
    %v242 = vstv %s241
    %v243 = vmul.f32 %v114, %v242
    %v244 = vadd.f32 %v240, %v243
    %s245 = sld [smem:[#allocation7 + $0x28]]
    %v246 = vstv %s245
    %v247 = vmul.f32 %v121, %v246
    %v248 = vadd.f32 %v244, %v247
    %s249 = sld [smem:[#allocation7 + $0x32]]
    %v250 = vstv %s249
    %v251 = vmul.f32 %v128, %v250
    %v252 = vadd.f32 %v248, %v251
    %s253 = sld [smem:[#allocation7 + $0x3c]]
    %v254 = vstv %s253
    %v255 = vmul.f32 %v135, %v254
    %v256 = vadd.f32 %v252, %v255
    %s257 = sld [smem:[#allocation7 + $0x46]]
    %v258 = vstv %s257
    %v259 = vmul.f32 %v142, %v258
    %v260 = vadd.f32 %v256, %v259
    %s261 = sld [smem:[#allocation7 + $0x50]]
    %v262 = vstv %s261
    %v263 = vmul.f32 %v149, %v262
    %v264 = vadd.f32 %v260, %v263
    %s265 = sld [smem:[#allocation7 + $0x5a]]
    %v266 = vstv %s265
    %v267 = vmul.f32 %v156, %v266
    %v268 = vadd.f32 %v264, %v267
    %s269 = sld [smem:[#allocation7 + $0x64]]
    %v270 = vstv %s269
    %v271 = vmul.f32 %v163, %v270
    %v272 = vadd.f32 %v268, %v271
    %s273 = sld [smem:[#allocation7 + $0x6e]]
    %v274 = vstv %s273
    %v275 = vmul.f32 %v170, %v274
    %v276 = vadd.f32 %v272, %v275
    %s277 = sld [smem:[#allocation7 + $0x78]]
    %v278 = vstv %s277
    %v279 = vmul.f32 %v177, %v278
    %v280 = vadd.f32 %v276, %v279
    %s281 = sld [smem:[#allocation7 + $0x82]]
    %v282 = vstv %s281
    %v283 = vmul.f32 %v184, %v282
    %v284 = vadd.f32 %v280, %v283
    %s285 = sld [smem:[#allocation7 + $0x8c]]
    %v286 = vstv %s285
    %v287 = vmul.f32 %v191, %v286
    %v288 = vadd.f32 %v284, %v287
    %s289 = sld [smem:[#allocation7 + $0x96]]
    %v290 = vstv %s289
    %v291 = vmul.f32 %v198, %v290
    %v292 = vadd.f32 %v288, %v291
    %s293 = sld [smem:[#allocation7 + $0xa0]]
    %v294 = vstv %s293
    %v295 = vmul.f32 %v205, %v294
    %v296 = vadd.f32 %v292, %v295
    %s297 = sld [smem:[#allocation7 + $0xaa]]
    %v298 = vstv %s297
    %v299 = vmul.f32 %v212, %v298
    %v300 = vadd.f32 %v296, %v299
    %s301 = sld [smem:[#allocation7 + $0xb4]]
    %v302 = vstv %s301
    %v303 = vmul.f32 %v219, %v302
    %v304 = vadd.f32 %v300, %v303
    %s305 = sld [smem:[#allocation7 + $0xbe]]
    %v306 = vstv %s305
    %v307 = vmul.f32 %v226, %v306
    %v308 = vadd.f32 %v304, %v307
    %v309 = vtanh.pop %v308
    %s310 = sld [smem:[#allocation10]]
    %v311 = vstv %s310
    %v312 = vmul.f32 %v309, %v311
    %s313 = sld [smem:[#allocation2]]
    %v314 = vstv %s313
    %v315 = vadd.f32 %v312, %v314
    %s316 = sld [smem:[#allocation7 + $0x1]]
    %v317 = vstv %s316
    %v318 = vmul.f32 %v93, %v317
    %s319 = sld [smem:[#allocation8 + $0x1]]
    %v320 = vstv %s319
    %v321 = vadd.f32 %v318, %v320
    %s322 = sld [smem:[#allocation7 + $0xb]]
    %v323 = vstv %s322
    %v324 = vmul.f32 %v100, %v323
    %v325 = vadd.f32 %v321, %v324
    %s326 = sld [smem:[#allocation7 + $0x15]]
    %v327 = vstv %s326
    %v328 = vmul.f32 %v107, %v327
    %v329 = vadd.f32 %v325, %v328
    %s330 = sld [smem:[#allocation7 + $0x1f]]
    %v331 = vstv %s330
    %v332 = vmul.f32 %v114, %v331
    %v333 = vadd.f32 %v329, %v332
    %s334 = sld [smem:[#allocation7 + $0x29]]
    %v335 = vstv %s334
    %v336 = vmul.f32 %v121, %v335
    %v337 = vadd.f32 %v333, %v336
    %s338 = sld [smem:[#allocation7 + $0x33]]
    %v339 = vstv %s338
    %v340 = vmul.f32 %v128, %v339
    %v341 = vadd.f32 %v337, %v340
    %s342 = sld [smem:[#allocation7 + $0x3d]]
    %v343 = vstv %s342
    %v344 = vmul.f32 %v135, %v343
    %v345 = vadd.f32 %v341, %v344
    %s346 = sld [smem:[#allocation7 + $0x47]]
    %v347 = vstv %s346
    %v348 = vmul.f32 %v142, %v347
    %v349 = vadd.f32 %v345, %v348
    %s350 = sld [smem:[#allocation7 + $0x51]]
    %v351 = vstv %s350
    %v352 = vmul.f32 %v149, %v351
    %v353 = vadd.f32 %v349, %v352
    %s354 = sld [smem:[#allocation7 + $0x5b]]
    %v355 = vstv %s354
    %v356 = vmul.f32 %v156, %v355
    %v357 = vadd.f32 %v353, %v356
    %s358 = sld [smem:[#allocation7 + $0x65]]
    %v359 = vstv %s358
    %v360 = vmul.f32 %v163, %v359
    %v361 = vadd.f32 %v357, %v360
    %s362 = sld [smem:[#allocation7 + $0x6f]]
    %v363 = vstv %s362
    %v364 = vmul.f32 %v170, %v363
    %v365 = vadd.f32 %v361, %v364
    %s366 = sld [smem:[#allocation7 + $0x79]]
    %v367 = vstv %s366
    %v368 = vmul.f32 %v177, %v367
    %v369 = vadd.f32 %v365, %v368
    %s370 = sld [smem:[#allocation7 + $0x83]]
    %v371 = vstv %s370
    %v372 = vmul.f32 %v184, %v371
    %v373 = vadd.f32 %v369, %v372
    %s374 = sld [smem:[#allocation7 + $0x8d]]
    %v375 = vstv %s374
    %v376 = vmul.f32 %v191, %v375
    %v377 = vadd.f32 %v373, %v376
    %s378 = sld [smem:[#allocation7 + $0x97]]
    %v379 = vstv %s378
    %v380 = vmul.f32 %v198, %v379
    %v381 = vadd.f32 %v377, %v380
    %s382 = sld [smem:[#allocation7 + $0xa1]]
    %v383 = vstv %s382
    %v384 = vmul.f32 %v205, %v383
    %v385 = vadd.f32 %v381, %v384
    %s386 = sld [smem:[#allocation7 + $0xab]]
    %v387 = vstv %s386
    %v388 = vmul.f32 %v212, %v387
    %v389 = vadd.f32 %v385, %v388
    %s390 = sld [smem:[#allocation7 + $0xb5]]
    %v391 = vstv %s390
    %v392 = vmul.f32 %v219, %v391
    %v393 = vadd.f32 %v389, %v392
    %s394 = sld [smem:[#allocation7 + $0xbf]]
    %v395 = vstv %s394
    %v396 = vmul.f32 %v226, %v395
    %v397 = vadd.f32 %v393, %v396
    %v398 = vtanh.pop %v397
    %s399 = sld [smem:[#allocation10 + $0x1]]
    %v400 = vstv %s399
    %v401 = vmul.f32 %v398, %v400
    %v402 = vadd.f32 %v315, %v401
    %s403 = sld [smem:[#allocation7 + $0x2]]
    %v404 = vstv %s403
    %v405 = vmul.f32 %v93, %v404
    %s406 = sld [smem:[#allocation8 + $0x2]]
    %v407 = vstv %s406
    %v408 = vadd.f32 %v405, %v407
    %s409 = sld [smem:[#allocation7 + $0xc]]
    %v410 = vstv %s409
    %v411 = vmul.f32 %v100, %v410
    %v412 = vadd.f32 %v408, %v411
    %s413 = sld [smem:[#allocation7 + $0x16]]
    %v414 = vstv %s413
    %v415 = vmul.f32 %v107, %v414
    %v416 = vadd.f32 %v412, %v415
    %s417 = sld [smem:[#allocation7 + $0x20]]
    %v418 = vstv %s417
    %v419 = vmul.f32 %v114, %v418
    %v420 = vadd.f32 %v416, %v419
    %s421 = sld [smem:[#allocation7 + $0x2a]]
    %v422 = vstv %s421
    %v423 = vmul.f32 %v121, %v422
    %v424 = vadd.f32 %v420, %v423
    %s425 = sld [smem:[#allocation7 + $0x34]]
    %v426 = vstv %s425
    %v427 = vmul.f32 %v128, %v426
    %v428 = vadd.f32 %v424, %v427
    %s429 = sld [smem:[#allocation7 + $0x3e]]
    %v430 = vstv %s429
    %v431 = vmul.f32 %v135, %v430
    %v432 = vadd.f32 %v428, %v431
    %s433 = sld [smem:[#allocation7 + $0x48]]
    %v434 = vstv %s433
    %v435 = vmul.f32 %v142, %v434
    %v436 = vadd.f32 %v432, %v435
    %s437 = sld [smem:[#allocation7 + $0x52]]
    %v438 = vstv %s437
    %v439 = vmul.f32 %v149, %v438
    %v440 = vadd.f32 %v436, %v439
    %s441 = sld [smem:[#allocation7 + $0x5c]]
    %v442 = vstv %s441
    %v443 = vmul.f32 %v156, %v442
    %v444 = vadd.f32 %v440, %v443
    %s445 = sld [smem:[#allocation7 + $0x66]]
    %v446 = vstv %s445
    %v447 = vmul.f32 %v163, %v446
    %v448 = vadd.f32 %v444, %v447
    %s449 = sld [smem:[#allocation7 + $0x70]]
    %v450 = vstv %s449
    %v451 = vmul.f32 %v170, %v450
    %v452 = vadd.f32 %v448, %v451
    %s453 = sld [smem:[#allocation7 + $0x7a]]
    %v454 = vstv %s453
    %v455 = vmul.f32 %v177, %v454
    %v456 = vadd.f32 %v452, %v455
    %s457 = sld [smem:[#allocation7 + $0x84]]
    %v458 = vstv %s457
    %v459 = vmul.f32 %v184, %v458
    %v460 = vadd.f32 %v456, %v459
    %s461 = sld [smem:[#allocation7 + $0x8e]]
    %v462 = vstv %s461
    %v463 = vmul.f32 %v191, %v462
    %v464 = vadd.f32 %v460, %v463
    %s465 = sld [smem:[#allocation7 + $0x98]]
    %v466 = vstv %s465
    %v467 = vmul.f32 %v198, %v466
    %v468 = vadd.f32 %v464, %v467
    %s469 = sld [smem:[#allocation7 + $0xa2]]
    %v470 = vstv %s469
    %v471 = vmul.f32 %v205, %v470
    %v472 = vadd.f32 %v468, %v471
    %s473 = sld [smem:[#allocation7 + $0xac]]
    %v474 = vstv %s473
    %v475 = vmul.f32 %v212, %v474
    %v476 = vadd.f32 %v472, %v475
    %s477 = sld [smem:[#allocation7 + $0xb6]]
    %v478 = vstv %s477
    %v479 = vmul.f32 %v219, %v478
    %v480 = vadd.f32 %v476, %v479
    %s481 = sld [smem:[#allocation7 + $0xc0]]
    %v482 = vstv %s481
    %v483 = vmul.f32 %v226, %v482
    %v484 = vadd.f32 %v480, %v483
    %v485 = vtanh.pop %v484
    %s486 = sld [smem:[#allocation10 + $0x2]]
    %v487 = vstv %s486
    %v488 = vmul.f32 %v485, %v487
    %v489 = vadd.f32 %v402, %v488
    %s490 = sld [smem:[#allocation7 + $0x3]]
    %v491 = vstv %s490
    %v492 = vmul.f32 %v93, %v491
    %s493 = sld [smem:[#allocation8 + $0x3]]
    %v494 = vstv %s493
    %v495 = vadd.f32 %v492, %v494
    %s496 = sld [smem:[#allocation7 + $0xd]]
    %v497 = vstv %s496
    %v498 = vmul.f32 %v100, %v497
    %v499 = vadd.f32 %v495, %v498
    %s500 = sld [smem:[#allocation7 + $0x17]]
    %v501 = vstv %s500
    %v502 = vmul.f32 %v107, %v501
    %v503 = vadd.f32 %v499, %v502
    %s504 = sld [smem:[#allocation7 + $0x21]]
    %v505 = vstv %s504
    %v506 = vmul.f32 %v114, %v505
    %v507 = vadd.f32 %v503, %v506
    %s508 = sld [smem:[#allocation7 + $0x2b]]
    %v509 = vstv %s508
    %v510 = vmul.f32 %v121, %v509
    %v511 = vadd.f32 %v507, %v510
    %s512 = sld [smem:[#allocation7 + $0x35]]
    %v513 = vstv %s512
    %v514 = vmul.f32 %v128, %v513
    %v515 = vadd.f32 %v511, %v514
    %s516 = sld [smem:[#allocation7 + $0x3f]]
    %v517 = vstv %s516
    %v518 = vmul.f32 %v135, %v517
    %v519 = vadd.f32 %v515, %v518
    %s520 = sld [smem:[#allocation7 + $0x49]]
    %v521 = vstv %s520
    %v522 = vmul.f32 %v142, %v521
    %v523 = vadd.f32 %v519, %v522
    %s524 = sld [smem:[#allocation7 + $0x53]]
    %v525 = vstv %s524
    %v526 = vmul.f32 %v149, %v525
    %v527 = vadd.f32 %v523, %v526
    %s528 = sld [smem:[#allocation7 + $0x5d]]
    %v529 = vstv %s528
    %v530 = vmul.f32 %v156, %v529
    %v531 = vadd.f32 %v527, %v530
    %s532 = sld [smem:[#allocation7 + $0x67]]
    %v533 = vstv %s532
    %v534 = vmul.f32 %v163, %v533
    %v535 = vadd.f32 %v531, %v534
    %s536 = sld [smem:[#allocation7 + $0x71]]
    %v537 = vstv %s536
    %v538 = vmul.f32 %v170, %v537
    %v539 = vadd.f32 %v535, %v538
    %s540 = sld [smem:[#allocation7 + $0x7b]]
    %v541 = vstv %s540
    %v542 = vmul.f32 %v177, %v541
    %v543 = vadd.f32 %v539, %v542
    %s544 = sld [smem:[#allocation7 + $0x85]]
    %v545 = vstv %s544
    %v546 = vmul.f32 %v184, %v545
    %v547 = vadd.f32 %v543, %v546
    %s548 = sld [smem:[#allocation7 + $0x8f]]
    %v549 = vstv %s548
    %v550 = vmul.f32 %v191, %v549
    %v551 = vadd.f32 %v547, %v550
    %s552 = sld [smem:[#allocation7 + $0x99]]
    %v553 = vstv %s552
    %v554 = vmul.f32 %v198, %v553
    %v555 = vadd.f32 %v551, %v554
    %s556 = sld [smem:[#allocation7 + $0xa3]]
    %v557 = vstv %s556
    %v558 = vmul.f32 %v205, %v557
    %v559 = vadd.f32 %v555, %v558
    %s560 = sld [smem:[#allocation7 + $0xad]]
    %v561 = vstv %s560
    %v562 = vmul.f32 %v212, %v561
    %v563 = vadd.f32 %v559, %v562
    %s564 = sld [smem:[#allocation7 + $0xb7]]
    %v565 = vstv %s564
    %v566 = vmul.f32 %v219, %v565
    %v567 = vadd.f32 %v563, %v566
    %s568 = sld [smem:[#allocation7 + $0xc1]]
    %v569 = vstv %s568
    %v570 = vmul.f32 %v226, %v569
    %v571 = vadd.f32 %v567, %v570
    %v572 = vtanh.pop %v571
    %s573 = sld [smem:[#allocation10 + $0x3]]
    %v574 = vstv %s573
    %v575 = vmul.f32 %v572, %v574
    %v576 = vadd.f32 %v489, %v575
    %s577 = sld [smem:[#allocation7 + $0x4]]
    %v578 = vstv %s577
    %v579 = vmul.f32 %v93, %v578
    %s580 = sld [smem:[#allocation8 + $0x4]]
    %v581 = vstv %s580
    %v582 = vadd.f32 %v579, %v581
    %s583 = sld [smem:[#allocation7 + $0xe]]
    %v584 = vstv %s583
    %v585 = vmul.f32 %v100, %v584
    %v586 = vadd.f32 %v582, %v585
    %s587 = sld [smem:[#allocation7 + $0x18]]
    %v588 = vstv %s587
    %v589 = vmul.f32 %v107, %v588
    %v590 = vadd.f32 %v586, %v589
    %s591 = sld [smem:[#allocation7 + $0x22]]
    %v592 = vstv %s591
    %v593 = vmul.f32 %v114, %v592
    %v594 = vadd.f32 %v590, %v593
    %s595 = sld [smem:[#allocation7 + $0x2c]]
    %v596 = vstv %s595
    %v597 = vmul.f32 %v121, %v596
    %v598 = vadd.f32 %v594, %v597
    %s599 = sld [smem:[#allocation7 + $0x36]]
    %v600 = vstv %s599
    %v601 = vmul.f32 %v128, %v600
    %v602 = vadd.f32 %v598, %v601
    %s603 = sld [smem:[#allocation7 + $0x40]]
    %v604 = vstv %s603
    %v605 = vmul.f32 %v135, %v604
    %v606 = vadd.f32 %v602, %v605
    %s607 = sld [smem:[#allocation7 + $0x4a]]
    %v608 = vstv %s607
    %v609 = vmul.f32 %v142, %v608
    %v610 = vadd.f32 %v606, %v609
    %s611 = sld [smem:[#allocation7 + $0x54]]
    %v612 = vstv %s611
    %v613 = vmul.f32 %v149, %v612
    %v614 = vadd.f32 %v610, %v613
    %s615 = sld [smem:[#allocation7 + $0x5e]]
    %v616 = vstv %s615
    %v617 = vmul.f32 %v156, %v616
    %v618 = vadd.f32 %v614, %v617
    %s619 = sld [smem:[#allocation7 + $0x68]]
    %v620 = vstv %s619
    %v621 = vmul.f32 %v163, %v620
    %v622 = vadd.f32 %v618, %v621
    %s623 = sld [smem:[#allocation7 + $0x72]]
    %v624 = vstv %s623
    %v625 = vmul.f32 %v170, %v624
    %v626 = vadd.f32 %v622, %v625
    %s627 = sld [smem:[#allocation7 + $0x7c]]
    %v628 = vstv %s627
    %v629 = vmul.f32 %v177, %v628
    %v630 = vadd.f32 %v626, %v629
    %s631 = sld [smem:[#allocation7 + $0x86]]
    %v632 = vstv %s631
    %v633 = vmul.f32 %v184, %v632
    %v634 = vadd.f32 %v630, %v633
    %s635 = sld [smem:[#allocation7 + $0x90]]
    %v636 = vstv %s635
    %v637 = vmul.f32 %v191, %v636
    %v638 = vadd.f32 %v634, %v637
    %s639 = sld [smem:[#allocation7 + $0x9a]]
    %v640 = vstv %s639
    %v641 = vmul.f32 %v198, %v640
    %v642 = vadd.f32 %v638, %v641
    %s643 = sld [smem:[#allocation7 + $0xa4]]
    %v644 = vstv %s643
    %v645 = vmul.f32 %v205, %v644
    %v646 = vadd.f32 %v642, %v645
    %s647 = sld [smem:[#allocation7 + $0xae]]
    %v648 = vstv %s647
    %v649 = vmul.f32 %v212, %v648
    %v650 = vadd.f32 %v646, %v649
    %s651 = sld [smem:[#allocation7 + $0xb8]]
    %v652 = vstv %s651
    %v653 = vmul.f32 %v219, %v652
    %v654 = vadd.f32 %v650, %v653
    %s655 = sld [smem:[#allocation7 + $0xc2]]
    %v656 = vstv %s655
    %v657 = vmul.f32 %v226, %v656
    %v658 = vadd.f32 %v654, %v657
    %v659 = vtanh.pop %v658
    %s660 = sld [smem:[#allocation10 + $0x4]]
    %v661 = vstv %s660
    %v662 = vmul.f32 %v659, %v661
    %v663 = vadd.f32 %v576, %v662
    %s664 = sld [smem:[#allocation7 + $0x5]]
    %v665 = vstv %s664
    %v666 = vmul.f32 %v93, %v665
    %s667 = sld [smem:[#allocation8 + $0x5]]
    %v668 = vstv %s667
    %v669 = vadd.f32 %v666, %v668
    %s670 = sld [smem:[#allocation7 + $0xf]]
    %v671 = vstv %s670
    %v672 = vmul.f32 %v100, %v671
    %v673 = vadd.f32 %v669, %v672
    %s674 = sld [smem:[#allocation7 + $0x19]]
    %v675 = vstv %s674
    %v676 = vmul.f32 %v107, %v675
    %v677 = vadd.f32 %v673, %v676
    %s678 = sld [smem:[#allocation7 + $0x23]]
    %v679 = vstv %s678
    %v680 = vmul.f32 %v114, %v679
    %v681 = vadd.f32 %v677, %v680
    %s682 = sld [smem:[#allocation7 + $0x2d]]
    %v683 = vstv %s682
    %v684 = vmul.f32 %v121, %v683
    %v685 = vadd.f32 %v681, %v684
    %s686 = sld [smem:[#allocation7 + $0x37]]
    %v687 = vstv %s686
    %v688 = vmul.f32 %v128, %v687
    %v689 = vadd.f32 %v685, %v688
    %s690 = sld [smem:[#allocation7 + $0x41]]
    %v691 = vstv %s690
    %v692 = vmul.f32 %v135, %v691
    %v693 = vadd.f32 %v689, %v692
    %s694 = sld [smem:[#allocation7 + $0x4b]]
    %v695 = vstv %s694
    %v696 = vmul.f32 %v142, %v695
    %v697 = vadd.f32 %v693, %v696
    %s698 = sld [smem:[#allocation7 + $0x55]]
    %v699 = vstv %s698
    %v700 = vmul.f32 %v149, %v699
    %v701 = vadd.f32 %v697, %v700
    %s702 = sld [smem:[#allocation7 + $0x5f]]
    %v703 = vstv %s702
    %v704 = vmul.f32 %v156, %v703
    %v705 = vadd.f32 %v701, %v704
    %s706 = sld [smem:[#allocation7 + $0x69]]
    %v707 = vstv %s706
    %v708 = vmul.f32 %v163, %v707
    %v709 = vadd.f32 %v705, %v708
    %s710 = sld [smem:[#allocation7 + $0x73]]
    %v711 = vstv %s710
    %v712 = vmul.f32 %v170, %v711
    %v713 = vadd.f32 %v709, %v712
    %s714 = sld [smem:[#allocation7 + $0x7d]]
    %v715 = vstv %s714
    %v716 = vmul.f32 %v177, %v715
    %v717 = vadd.f32 %v713, %v716
    %s718 = sld [smem:[#allocation7 + $0x87]]
    %v719 = vstv %s718
    %v720 = vmul.f32 %v184, %v719
    %v721 = vadd.f32 %v717, %v720
    %s722 = sld [smem:[#allocation7 + $0x91]]
    %v723 = vstv %s722
    %v724 = vmul.f32 %v191, %v723
    %v725 = vadd.f32 %v721, %v724
    %s726 = sld [smem:[#allocation7 + $0x9b]]
    %v727 = vstv %s726
    %v728 = vmul.f32 %v198, %v727
    %v729 = vadd.f32 %v725, %v728
    %s730 = sld [smem:[#allocation7 + $0xa5]]
    %v731 = vstv %s730
    %v732 = vmul.f32 %v205, %v731
    %v733 = vadd.f32 %v729, %v732
    %s734 = sld [smem:[#allocation7 + $0xaf]]
    %v735 = vstv %s734
    %v736 = vmul.f32 %v212, %v735
    %v737 = vadd.f32 %v733, %v736
    %s738 = sld [smem:[#allocation7 + $0xb9]]
    %v739 = vstv %s738
    %v740 = vmul.f32 %v219, %v739
    %v741 = vadd.f32 %v737, %v740
    %s742 = sld [smem:[#allocation7 + $0xc3]]
    %v743 = vstv %s742
    %v744 = vmul.f32 %v226, %v743
    %v745 = vadd.f32 %v741, %v744
    %v746 = vtanh.pop %v745
    %s747 = sld [smem:[#allocation10 + $0x5]]
    %v748 = vstv %s747
    %v749 = vmul.f32 %v746, %v748
    %v750 = vadd.f32 %v663, %v749
    %s751 = sld [smem:[#allocation7 + $0x6]]
    %v752 = vstv %s751
    %v753 = vmul.f32 %v93, %v752
    %s754 = sld [smem:[#allocation8 + $0x6]]
    %v755 = vstv %s754
    %v756 = vadd.f32 %v753, %v755
    %s757 = sld [smem:[#allocation7 + $0x10]]
    %v758 = vstv %s757
    %v759 = vmul.f32 %v100, %v758
    %v760 = vadd.f32 %v756, %v759
    %s761 = sld [smem:[#allocation7 + $0x1a]]
    %v762 = vstv %s761
    %v763 = vmul.f32 %v107, %v762
    %v764 = vadd.f32 %v760, %v763
    %s765 = sld [smem:[#allocation7 + $0x24]]
    %v766 = vstv %s765
    %v767 = vmul.f32 %v114, %v766
    %v768 = vadd.f32 %v764, %v767
    %s769 = sld [smem:[#allocation7 + $0x2e]]
    %v770 = vstv %s769
    %v771 = vmul.f32 %v121, %v770
    %v772 = vadd.f32 %v768, %v771
    %s773 = sld [smem:[#allocation7 + $0x38]]
    %v774 = vstv %s773
    %v775 = vmul.f32 %v128, %v774
    %v776 = vadd.f32 %v772, %v775
    %s777 = sld [smem:[#allocation7 + $0x42]]
    %v778 = vstv %s777
    %v779 = vmul.f32 %v135, %v778
    %v780 = vadd.f32 %v776, %v779
    %s781 = sld [smem:[#allocation7 + $0x4c]]
    %v782 = vstv %s781
    %v783 = vmul.f32 %v142, %v782
    %v784 = vadd.f32 %v780, %v783
    %s785 = sld [smem:[#allocation7 + $0x56]]
    %v786 = vstv %s785
    %v787 = vmul.f32 %v149, %v786
    %v788 = vadd.f32 %v784, %v787
    %s789 = sld [smem:[#allocation7 + $0x60]]
    %v790 = vstv %s789
    %v791 = vmul.f32 %v156, %v790
    %v792 = vadd.f32 %v788, %v791
    %s793 = sld [smem:[#allocation7 + $0x6a]]
    %v794 = vstv %s793
    %v795 = vmul.f32 %v163, %v794
    %v796 = vadd.f32 %v792, %v795
    %s797 = sld [smem:[#allocation7 + $0x74]]
    %v798 = vstv %s797
    %v799 = vmul.f32 %v170, %v798
    %v800 = vadd.f32 %v796, %v799
    %s801 = sld [smem:[#allocation7 + $0x7e]]
    %v802 = vstv %s801
    %v803 = vmul.f32 %v177, %v802
    %v804 = vadd.f32 %v800, %v803
    %s805 = sld [smem:[#allocation7 + $0x88]]
    %v806 = vstv %s805
    %v807 = vmul.f32 %v184, %v806
    %v808 = vadd.f32 %v804, %v807
    %s809 = sld [smem:[#allocation7 + $0x92]]
    %v810 = vstv %s809
    %v811 = vmul.f32 %v191, %v810
    %v812 = vadd.f32 %v808, %v811
    %s813 = sld [smem:[#allocation7 + $0x9c]]
    %v814 = vstv %s813
    %v815 = vmul.f32 %v198, %v814
    %v816 = vadd.f32 %v812, %v815
    %s817 = sld [smem:[#allocation7 + $0xa6]]
    %v818 = vstv %s817
    %v819 = vmul.f32 %v205, %v818
    %v820 = vadd.f32 %v816, %v819
    %s821 = sld [smem:[#allocation7 + $0xb0]]
    %v822 = vstv %s821
    %v823 = vmul.f32 %v212, %v822
    %v824 = vadd.f32 %v820, %v823
    %s825 = sld [smem:[#allocation7 + $0xba]]
    %v826 = vstv %s825
    %v827 = vmul.f32 %v219, %v826
    %v828 = vadd.f32 %v824, %v827
    %s829 = sld [smem:[#allocation7 + $0xc4]]
    %v830 = vstv %s829
    %v831 = vmul.f32 %v226, %v830
    %v832 = vadd.f32 %v828, %v831
    %v833 = vtanh.pop %v832
    %s834 = sld [smem:[#allocation10 + $0x6]]
    %v835 = vstv %s834
    %v836 = vmul.f32 %v833, %v835
    %v837 = vadd.f32 %v750, %v836
    %s838 = sld [smem:[#allocation7 + $0x7]]
    %v839 = vstv %s838
    %v840 = vmul.f32 %v93, %v839
    %s841 = sld [smem:[#allocation8 + $0x7]]
    %v842 = vstv %s841
    %v843 = vadd.f32 %v840, %v842
    %s844 = sld [smem:[#allocation7 + $0x11]]
    %v845 = vstv %s844
    %v846 = vmul.f32 %v100, %v845
    %v847 = vadd.f32 %v843, %v846
    %s848 = sld [smem:[#allocation7 + $0x1b]]
    %v849 = vstv %s848
    %v850 = vmul.f32 %v107, %v849
    %v851 = vadd.f32 %v847, %v850
    %s852 = sld [smem:[#allocation7 + $0x25]]
    %v853 = vstv %s852
    %v854 = vmul.f32 %v114, %v853
    %v855 = vadd.f32 %v851, %v854
    %s856 = sld [smem:[#allocation7 + $0x2f]]
    %v857 = vstv %s856
    %v858 = vmul.f32 %v121, %v857
    %v859 = vadd.f32 %v855, %v858
    %s860 = sld [smem:[#allocation7 + $0x39]]
    %v861 = vstv %s860
    %v862 = vmul.f32 %v128, %v861
    %v863 = vadd.f32 %v859, %v862
    %s864 = sld [smem:[#allocation7 + $0x43]]
    %v865 = vstv %s864
    %v866 = vmul.f32 %v135, %v865
    %v867 = vadd.f32 %v863, %v866
    %s868 = sld [smem:[#allocation7 + $0x4d]]
    %v869 = vstv %s868
    %v870 = vmul.f32 %v142, %v869
    %v871 = vadd.f32 %v867, %v870
    %s872 = sld [smem:[#allocation7 + $0x57]]
    %v873 = vstv %s872
    %v874 = vmul.f32 %v149, %v873
    %v875 = vadd.f32 %v871, %v874
    %s876 = sld [smem:[#allocation7 + $0x61]]
    %v877 = vstv %s876
    %v878 = vmul.f32 %v156, %v877
    %v879 = vadd.f32 %v875, %v878
    %s880 = sld [smem:[#allocation7 + $0x6b]]
    %v881 = vstv %s880
    %v882 = vmul.f32 %v163, %v881
    %v883 = vadd.f32 %v879, %v882
    %s884 = sld [smem:[#allocation7 + $0x75]]
    %v885 = vstv %s884
    %v886 = vmul.f32 %v170, %v885
    %v887 = vadd.f32 %v883, %v886
    %s888 = sld [smem:[#allocation7 + $0x7f]]
    %v889 = vstv %s888
    %v890 = vmul.f32 %v177, %v889
    %v891 = vadd.f32 %v887, %v890
    %s892 = sld [smem:[#allocation7 + $0x89]]
    %v893 = vstv %s892
    %v894 = vmul.f32 %v184, %v893
    %v895 = vadd.f32 %v891, %v894
    %s896 = sld [smem:[#allocation7 + $0x93]]
    %v897 = vstv %s896
    %v898 = vmul.f32 %v191, %v897
    %v899 = vadd.f32 %v895, %v898
    %s900 = sld [smem:[#allocation7 + $0x9d]]
    %v901 = vstv %s900
    %v902 = vmul.f32 %v198, %v901
    %v903 = vadd.f32 %v899, %v902
    %s904 = sld [smem:[#allocation7 + $0xa7]]
    %v905 = vstv %s904
    %v906 = vmul.f32 %v205, %v905
    %v907 = vadd.f32 %v903, %v906
    %s908 = sld [smem:[#allocation7 + $0xb1]]
    %v909 = vstv %s908
    %v910 = vmul.f32 %v212, %v909
    %v911 = vadd.f32 %v907, %v910
    %s912 = sld [smem:[#allocation7 + $0xbb]]
    %v913 = vstv %s912
    %v914 = vmul.f32 %v219, %v913
    %v915 = vadd.f32 %v911, %v914
    %s916 = sld [smem:[#allocation7 + $0xc5]]
    %v917 = vstv %s916
    %v918 = vmul.f32 %v226, %v917
    %v919 = vadd.f32 %v915, %v918
    %v920 = vtanh.pop %v919
    %s921 = sld [smem:[#allocation10 + $0x7]]
    %v922 = vstv %s921
    %v923 = vmul.f32 %v920, %v922
    %v924 = vadd.f32 %v837, %v923
    %s925 = sld [smem:[#allocation7 + $0x8]]
    %v926 = vstv %s925
    %v927 = vmul.f32 %v93, %v926
    %s928 = sld [smem:[#allocation8 + $0x8]]
    %v929 = vstv %s928
    %v930 = vadd.f32 %v927, %v929
    %s931 = sld [smem:[#allocation7 + $0x12]]
    %v932 = vstv %s931
    %v933 = vmul.f32 %v100, %v932
    %v934 = vadd.f32 %v930, %v933
    %s935 = sld [smem:[#allocation7 + $0x1c]]
    %v936 = vstv %s935
    %v937 = vmul.f32 %v107, %v936
    %v938 = vadd.f32 %v934, %v937
    %s939 = sld [smem:[#allocation7 + $0x26]]
    %v940 = vstv %s939
    %v941 = vmul.f32 %v114, %v940
    %v942 = vadd.f32 %v938, %v941
    %s943 = sld [smem:[#allocation7 + $0x30]]
    %v944 = vstv %s943
    %v945 = vmul.f32 %v121, %v944
    %v946 = vadd.f32 %v942, %v945
    %s947 = sld [smem:[#allocation7 + $0x3a]]
    %v948 = vstv %s947
    %v949 = vmul.f32 %v128, %v948
    %v950 = vadd.f32 %v946, %v949
    %s951 = sld [smem:[#allocation7 + $0x44]]
    %v952 = vstv %s951
    %v953 = vmul.f32 %v135, %v952
    %v954 = vadd.f32 %v950, %v953
    %s955 = sld [smem:[#allocation7 + $0x4e]]
    %v956 = vstv %s955
    %v957 = vmul.f32 %v142, %v956
    %v958 = vadd.f32 %v954, %v957
    %s959 = sld [smem:[#allocation7 + $0x58]]
    %v960 = vstv %s959
    %v961 = vmul.f32 %v149, %v960
    %v962 = vadd.f32 %v958, %v961
    %s963 = sld [smem:[#allocation7 + $0x62]]
    %v964 = vstv %s963
    %v965 = vmul.f32 %v156, %v964
    %v966 = vadd.f32 %v962, %v965
    %s967 = sld [smem:[#allocation7 + $0x6c]]
    %v968 = vstv %s967
    %v969 = vmul.f32 %v163, %v968
    %v970 = vadd.f32 %v966, %v969
    %s971 = sld [smem:[#allocation7 + $0x76]]
    %v972 = vstv %s971
    %v973 = vmul.f32 %v170, %v972
    %v974 = vadd.f32 %v970, %v973
    %s975 = sld [smem:[#allocation7 + $0x80]]
    %v976 = vstv %s975
    %v977 = vmul.f32 %v177, %v976
    %v978 = vadd.f32 %v974, %v977
    %s979 = sld [smem:[#allocation7 + $0x8a]]
    %v980 = vstv %s979
    %v981 = vmul.f32 %v184, %v980
    %v982 = vadd.f32 %v978, %v981
    %s983 = sld [smem:[#allocation7 + $0x94]]
    %v984 = vstv %s983
    %v985 = vmul.f32 %v191, %v984
    %v986 = vadd.f32 %v982, %v985
    %s987 = sld [smem:[#allocation7 + $0x9e]]
    %v988 = vstv %s987
    %v989 = vmul.f32 %v198, %v988
    %v990 = vadd.f32 %v986, %v989
    %s991 = sld [smem:[#allocation7 + $0xa8]]
    %v992 = vstv %s991
    %v993 = vmul.f32 %v205, %v992
    %v994 = vadd.f32 %v990, %v993
    %s995 = sld [smem:[#allocation7 + $0xb2]]
    %v996 = vstv %s995
    %v997 = vmul.f32 %v212, %v996
    %v998 = vadd.f32 %v994, %v997
    %s999 = sld [smem:[#allocation7 + $0xbc]]
    %v1000 = vstv %s999
    %v1001 = vmul.f32 %v219, %v1000
    %v1002 = vadd.f32 %v998, %v1001
    %s1003 = sld [smem:[#allocation7 + $0xc6]]
    %v1004 = vstv %s1003
    %v1005 = vmul.f32 %v226, %v1004
    %v1006 = vadd.f32 %v1002, %v1005
    %v1007 = vtanh.pop %v1006
    %s1008 = sld [smem:[#allocation10 + $0x8]]
    %v1009 = vstv %s1008
    %v1010 = vmul.f32 %v1007, %v1009
    %v1011 = vadd.f32 %v924, %v1010
    %s1012 = sld [smem:[#allocation7 + $0x9]]
    %v1013 = vstv %s1012
    %v1014 = vmul.f32 %v93, %v1013
    %s1015 = sld [smem:[#allocation8 + $0x9]]
    %v1016 = vstv %s1015
    %v1017 = vadd.f32 %v1014, %v1016
    %s1018 = sld [smem:[#allocation7 + $0x13]]
    %v1019 = vstv %s1018
    %v1020 = vmul.f32 %v100, %v1019
    %v1021 = vadd.f32 %v1017, %v1020
    %s1022 = sld [smem:[#allocation7 + $0x1d]]
    %v1023 = vstv %s1022
    %v1024 = vmul.f32 %v107, %v1023
    %v1025 = vadd.f32 %v1021, %v1024
    %s1026 = sld [smem:[#allocation7 + $0x27]]
    %v1027 = vstv %s1026
    %v1028 = vmul.f32 %v114, %v1027
    %v1029 = vadd.f32 %v1025, %v1028
    %s1030 = sld [smem:[#allocation7 + $0x31]]
    %v1031 = vstv %s1030
    %v1032 = vmul.f32 %v121, %v1031
    %v1033 = vadd.f32 %v1029, %v1032
    %s1034 = sld [smem:[#allocation7 + $0x3b]]
    %v1035 = vstv %s1034
    %v1036 = vmul.f32 %v128, %v1035
    %v1037 = vadd.f32 %v1033, %v1036
    %s1038 = sld [smem:[#allocation7 + $0x45]]
    %v1039 = vstv %s1038
    %v1040 = vmul.f32 %v135, %v1039
    %v1041 = vadd.f32 %v1037, %v1040
    %s1042 = sld [smem:[#allocation7 + $0x4f]]
    %v1043 = vstv %s1042
    %v1044 = vmul.f32 %v142, %v1043
    %v1045 = vadd.f32 %v1041, %v1044
    %s1046 = sld [smem:[#allocation7 + $0x59]]
    %v1047 = vstv %s1046
    %v1048 = vmul.f32 %v149, %v1047
    %v1049 = vadd.f32 %v1045, %v1048
    %s1050 = sld [smem:[#allocation7 + $0x63]]
    %v1051 = vstv %s1050
    %v1052 = vmul.f32 %v156, %v1051
    %v1053 = vadd.f32 %v1049, %v1052
    %s1054 = sld [smem:[#allocation7 + $0x6d]]
    %v1055 = vstv %s1054
    %v1056 = vmul.f32 %v163, %v1055
    %v1057 = vadd.f32 %v1053, %v1056
    %s1058 = sld [smem:[#allocation7 + $0x77]]
    %v1059 = vstv %s1058
    %v1060 = vmul.f32 %v170, %v1059
    %v1061 = vadd.f32 %v1057, %v1060
    %s1062 = sld [smem:[#allocation7 + $0x81]]
    %v1063 = vstv %s1062
    %v1064 = vmul.f32 %v177, %v1063
    %v1065 = vadd.f32 %v1061, %v1064
    %s1066 = sld [smem:[#allocation7 + $0x8b]]
    %v1067 = vstv %s1066
    %v1068 = vmul.f32 %v184, %v1067
    %v1069 = vadd.f32 %v1065, %v1068
    %s1070 = sld [smem:[#allocation7 + $0x95]]
    %v1071 = vstv %s1070
    %v1072 = vmul.f32 %v191, %v1071
    %v1073 = vadd.f32 %v1069, %v1072
    %s1074 = sld [smem:[#allocation7 + $0x9f]]
    %v1075 = vstv %s1074
    %v1076 = vmul.f32 %v198, %v1075
    %v1077 = vadd.f32 %v1073, %v1076
    %s1078 = sld [smem:[#allocation7 + $0xa9]]
    %v1079 = vstv %s1078
    %v1080 = vmul.f32 %v205, %v1079
    %v1081 = vadd.f32 %v1077, %v1080
    %s1082 = sld [smem:[#allocation7 + $0xb3]]
    %v1083 = vstv %s1082
    %v1084 = vmul.f32 %v212, %v1083
    %v1085 = vadd.f32 %v1081, %v1084
    %s1086 = sld [smem:[#allocation7 + $0xbd]]
    %v1087 = vstv %s1086
    %v1088 = vmul.f32 %v219, %v1087
    %v1089 = vadd.f32 %v1085, %v1088
    %s1090 = sld [smem:[#allocation7 + $0xc7]]
    %v1091 = vstv %s1090
    %v1092 = vmul.f32 %v226, %v1091
    %v1093 = vadd.f32 %v1089, %v1092
    %v1094 = vtanh.pop %v1093
    %s1095 = sld [smem:[#allocation10 + $0x9]]
    %v1096 = vstv %s1095
    %v1097 = vmul.f32 %v1094, %v1096
    %v1098 = vadd.f32 %v1011, %v1097
    %1099 = vst [vmem:[%s7] sm:$0xff] %v1098
    // Predicated region
    $region50: #{learned_fn.1} parent=1 // pred_check
      _
    $region51: #{learned_fn.1} parent=1 // pred_check_branch
      %1101 = sbr.rel (0) target = $region53
    $region52: #{learned_fn.1} parent=1 // pred_region
      _
    $region53: #{learned_fn.1} parent=1 // pred_fallthru
      _
    // Predicated region
    $region54: #{learned_fn.1} parent=1 // pred_check
      _
    $region55: #{learned_fn.1} parent=1 // pred_check_branch
      %1103 = sbr.rel (0) target = $region57
    $region56: #{learned_fn.1} parent=1 // pred_region
      _
    $region57: #{learned_fn.1} parent=1 // pred_fallthru
      _
    %1104 = vsyncpa [#allocation4], 1
    %1105 = vsyncpa [#allocation6], 1
    %1106 = vsyncpa [#allocation9], 1

</llo_original>
